<compile_context>
chip_gen: v7x
topology: tpu7x:2x2x1
jax: 0.10.0
libtpu: 0.0.40
codegen_flags: <defaults>
</compile_context>

<pallas_src>
import functools

import jax
import jax.numpy as jnp
from jax import lax
from jax.experimental import pallas as pl
from jax.experimental.pallas import tpu as pltpu


def _round_up(x, m):
    return ((x + m - 1) // m) * m


def siamese_kernel(ids_ref, fused_ref, out_ref, *, compute_dtype):
    # ids_ref   : (1, L, 3*TB) int32  -- ids[l, branch*TB + b], branch in {anchor, pos, neg}
    # fused_ref : (H_pad, V_pad)      -- (Embedding @ W^T + bias)^T, zero padded; embedding
    #                                    row 0 is the padding row, so column 0 == bias.
    # out_ref   : (2, TB)   float32   -- row 0 = d(a, p), row 1 = d(a, n)
    _, seq_len, width = ids_ref.shape
    tb = width // 3
    v_pad = fused_ref.shape[1]

    fused_t = fused_ref[...]                                      # (H_pad, V_pad), loaded once
    ids = ids_ref[0]                                              # (L, 3*TB) int32
    vocab = lax.broadcasted_iota(jnp.int32, (v_pad, width), 0)    # hoisted (no CSE in loop)

    # Embedding-gather + Linear as ONE one-hot matmul per position (small vocab); the
    # max_pool1d over the full sequence is a running jnp.maximum over the L position slabs.
    # For very long max_length switch this to lax.fori_loop over a dynamic ids_ref slice.
    # TODO(synk): for large vocabularies replace the one-hot matmul with a DMA gather.
    pooled = None
    for l in range(seq_len):                 # static & short -> unrolled (LLO visibility)
        onehot = (ids[l:l + 1, :] == vocab).astype(compute_dtype)             # (V_pad, 3TB)
        x_l = jnp.dot(fused_t, onehot, preferred_element_type=jnp.float32)    # (H_pad, 3TB)
        pooled = x_l if pooled is None else jnp.maximum(pooled, x_l)

    a = pooled[:, 0:tb]
    p = pooled[:, tb:2 * tb]
    n = pooled[:, 2 * tb:3 * tb]

    # cosine_distance = 1 - dot / (max(||u||,eps) * max(||v||,eps)).  Clamping the *squared*
    # norms at eps^2 and using rsqrt (EUP slot) is exactly equivalent; anchor norm reused.
    eps2 = jnp.float32(1e-16)
    inv_a = lax.rsqrt(jnp.maximum(jnp.sum(a * a, axis=0, keepdims=True), eps2))   # (1, TB)
    inv_p = lax.rsqrt(jnp.maximum(jnp.sum(p * p, axis=0, keepdims=True), eps2))
    inv_n = lax.rsqrt(jnp.maximum(jnp.sum(n * n, axis=0, keepdims=True), eps2))
    d_ap = 1.0 - jnp.sum(a * p, axis=0, keepdims=True) * inv_a * inv_p
    d_an = 1.0 - jnp.sum(a * n, axis=0, keepdims=True) * inv_a * inv_n

    out_ref[0:1, :] = d_ap
    out_ref[1:2, :] = d_an


def siamese_forward(anchor_ids, positive_ids, negative_ids, embedding, weight, bias,
                    *, compute_dtype=jnp.bfloat16, batch_tile=256):
    """anchor/positive/negative_ids: int (B, L).  Returns (d_ap, d_an), each float32 (B,)."""
    B, L = anchor_ids.shape
    V, H = embedding.shape            # V = vocab_size + 1 (row 0 = padding row)
    H_out, H_in = weight.shape        # PyTorch Linear layout (out, in)
    assert H_in == H
    assert batch_tile % 128 == 0 and batch_tile >= 128

    H_pad = _round_up(H_out, 128)     # hidden lives on sublanes / MXU rows
    V_pad = _round_up(V, 8)

    # Batch tile: 128-aligned when tiled; >= 2 grid steps when the batch allows it so the
    # "parallel" axis shards across both TensorCores on v7x.  Per-tile VMEM here is tiny
    # (ids 3*TB*L*4 B dense, table H_pad*V_pad, intermediates ~3 * H_pad*3TB*4 B); re-derive
    # batch_tile if H_out / L / vocab grow substantially (v7x has only 64 MiB VMEM).
    if B < 128:
        TB = _round_up(B, 8)                       # one small tile
    else:
        n128 = _round_up(B, 128) // 128
        TB = 128 * max(1, min(batch_tile // 128, (n128 + 1) // 2))
    B_pad = _round_up(B, TB)
    num_tiles = B_pad // TB

    # --- Host-side fusion: Embedding o Linear -> one table, bias folded through the pool
    #     (max_l(x_l + b) == max_l(x_l) + b).  Padded hidden columns / vocab rows stay 0. ---
    fused = jnp.dot(embedding.astype(jnp.float32), weight.astype(jnp.float32).T,
                    precision=lax.Precision.HIGHEST) + bias.astype(jnp.float32)[None, :]
    fused_t = jnp.zeros((H_pad, V_pad), jnp.float32).at[:H_out, :V].set(fused.T)
    fused_t = fused_t.astype(compute_dtype)

    # --- Pre-interleave ids so each grid tile sees a dense (L, 3*TB) int32 slab:
    #     ids_tiled[t, l, branch*TB + b] = ids[branch, t*TB + b, l].  Batch padding uses
    #     id 0 (padding token); those rows are discarded on return. ---
    ids = jnp.stack([anchor_ids, positive_ids, negative_ids], axis=0).astype(jnp.int32)
    if B_pad != B:
        ids = jnp.pad(ids, ((0, 0), (0, B_pad - B), (0, 0)))
    ids = ids.reshape(3, num_tiles, TB, L)
    ids = jnp.transpose(ids, (1, 3, 0, 2)).reshape(num_tiles, L, 3 * TB)

    kernel = functools.partial(siamese_kernel, compute_dtype=compute_dtype)
    itemsize = jnp.dtype(compute_dtype).itemsize
    cost = pl.CostEstimate(
        flops=2 * H_pad * V_pad * 3 * B_pad * L,            # the one-hot matmuls
        transcendentals=3 * B_pad,                          # one rsqrt per norm
        bytes_accessed=int(ids.size) * 4 + H_pad * V_pad * itemsize + 2 * B_pad * 4,
    )

    out = pl.pallas_call(
        kernel,
        out_shape=jax.ShapeDtypeStruct((2, B_pad), jnp.float32),
        grid_spec=pltpu.PrefetchScalarGridSpec(
            num_scalar_prefetch=0,
            grid=(num_tiles,),
            in_specs=[
                # dense lane-major id slab (no trailing-dim-1 padding blowup)
                pl.BlockSpec((1, L, 3 * TB), lambda i: (i, 0, 0)),
                # fused table: constant block index -> fetched once, stays resident
                pl.BlockSpec((H_pad, V_pad), lambda i: (0, 0)),
            ],
            out_specs=pl.BlockSpec((2, TB), lambda i: (0, i)),    # tiny lane-dense output
        ),
        compiler_params=pltpu.CompilerParams(
            dimension_semantics=("parallel",),
            vmem_limit_bytes=32 * 1024 * 1024,
        ),
        cost_estimate=cost,
    )(ids, fused_t)

    return out[0, :B], out[1, :B]


def _reference(anchor_ids, positive_ids, negative_ids, embedding, weight, bias):
    def encode(ids):
        x = embedding[ids]                       # (B, L, H)
        y = x @ weight.T + bias                  # Linear
        return jnp.max(y, axis=1)                # max-pool over the sequence

    def cos_dist(u, v):
        eps = 1e-8
        dot = jnp.sum(u * v, axis=1)
        nu = jnp.sqrt(jnp.sum(u * u, axis=1))
        nv = jnp.sqrt(jnp.sum(v * v, axis=1))
        return 1.0 - dot / (jnp.maximum(nu, eps) * jnp.maximum(nv, eps))

    a, p, n = encode(anchor_ids), encode(positive_ids), encode(negative_ids)
    return cos_dist(a, p), cos_dist(a, n)


if __name__ == "__main__":
    B, L, H = 2, 8, 32          # batch, max_length, hidden_size
    VOCAB = 30                  # config['vocab_size']; table has VOCAB + 1 rows

    key = jax.random.PRNGKey(0)
    k_emb, k_w, k_b, k_a, k_p, k_n, k_big = jax.random.split(key, 7)

    embedding = jax.random.normal(k_emb, (VOCAB + 1, H), dtype=jnp.float32) * 0.1
    embedding = embedding.at[0].set(0.0)  # padding_idx=0
    weight = jax.random.normal(k_w, (H, H), dtype=jnp.float32) * 0.1  # (out, in)
    bias = jax.random.normal(k_b, (H,), dtype=jnp.float32) * 0.1

    anchor = jax.random.randint(k_a, (B, L), 0, VOCAB + 1, dtype=jnp.int32)
    positive = jax.random.randint(k_p, (B, L), 0, VOCAB + 1, dtype=jnp.int32)
    negative = jax.random.randint(k_n, (B, L), 0, VOCAB + 1, dtype=jnp.int32)

    r_ap, r_an = _reference(anchor, positive, negative, embedding, weight, bias)

    # f32 compute path: matches the f32 reference tightly.
    d_ap32, d_an32 = siamese_forward(anchor, positive, negative, embedding, weight, bias,
                                     compute_dtype=jnp.float32)
    jax.block_until_ready((d_ap32, d_an32))
    assert jnp.allclose(d_ap32, r_ap, rtol=1e-3, atol=1e-3)
    assert jnp.allclose(d_an32, r_an, rtol=1e-3, atol=1e-3)

    # Default bf16-matmul / f32-accumulation path (MXU-native on v6e/v7x).
    d_ap, d_an = siamese_forward(anchor, positive, negative, embedding, weight, bias)
    jax.block_until_ready((d_ap, d_an))
    assert jnp.allclose(d_ap, r_ap, rtol=2e-2, atol=2e-2)
    assert jnp.allclose(d_an, r_an, rtol=2e-2, atol=2e-2)

    # Multi-tile path (grid > 1, 128-aligned tiles): exercises the parallel batch grid.
    Bb = 320
    ids_big = jax.random.randint(k_big, (3, Bb, L), 0, VOCAB + 1, dtype=jnp.int32)
    rb_ap, rb_an = _reference(ids_big[0], ids_big[1], ids_big[2], embedding, weight, bias)
    db_ap, db_an = siamese_forward(ids_big[0], ids_big[1], ids_big[2],
                                   embedding, weight, bias)
    jax.block_until_ready((db_ap, db_an))
    assert jnp.allclose(db_ap, rb_ap, rtol=2e-2, atol=2e-2)
    assert jnp.allclose(db_an, rb_an, rtol=2e-2, atol=2e-2)

    print("KERNEL_OK")
</pallas_src>

<mosaic_0001>
module attributes {stable_mosaic.version = 11 : i64} {
  func.func @siamese_kernel(%arg0: i32, %arg1: memref<1x8x24xi32, #tpu.memory_space<vmem>>, %arg2: memref<128x32xf32, #tpu.memory_space<vmem>>, %arg3: memref<2x8xf32, #tpu.memory_space<vmem>>) attributes {dimension_semantics = [#tpu.dimension_semantics<parallel>], iteration_bounds = array<i64: 1>, scalar_prefetch = 0 : i64, scratch_operands = 0 : i64, tpu.core_type = #tpu.core_type<tc>, window_params = [{transform_indices = @transform_0, window_bounds = array<i64: 1, 8, 24>}, {pipeline_mode = #tpu.pipeline_mode<synchronous>, transform_indices = @transform_1, window_bounds = array<i64: 128, 32>}, {transform_indices = @transform_2, window_bounds = array<i64: 2, 8>}]} {
    %c0 = arith.constant 0 : index
    %c0_0 = arith.constant 0 : index
    %0 = vector.load %arg2[%c0, %c0_0] : memref<128x32xf32, #tpu.memory_space<vmem>>, vector<128x32xf32>
    %c0_1 = arith.constant 0 : index
    %c0_2 = arith.constant 0 : index
    %c0_3 = arith.constant 0 : index
    %1 = vector.load %arg1[%c0_1, %c0_2, %c0_3] : memref<1x8x24xi32, #tpu.memory_space<vmem>>, vector<1x8x24xi32>
    %2 = vector.shape_cast %1 : vector<1x8x24xi32> to vector<8x24xi32>
    %3 = tpu.iota {dimensions = array<i32: 0>} : vector<32x24xi32>
    %4 = vector.extract_strided_slice %2 {offsets = [0, 0], sizes = [1, 24], strides = [1, 1]} : vector<8x24xi32> to vector<1x24xi32>
    %5 = vector.broadcast %4 : vector<1x24xi32> to vector<32x24xi32>
    %6 = arith.cmpi eq, %5, %3 : vector<32x24xi32>
    %7 = arith.extui %6 : vector<32x24xi1> to vector<32x24xi32>
    %8 = arith.sitofp %7 : vector<32x24xi32> to vector<32x24xf32>
    %cst = arith.constant dense<0.000000e+00> : vector<128x24xf32>
    %9 = tpu.matmul %0, %8, %cst {dimension_numbers = #tpu.dot_dimension_numbers<[1], [0], [0], [1], [0, 0, 1, 1], [], []>} : vector<128x32xf32>, vector<32x24xf32>, vector<128x24xf32> -> vector<128x24xf32>
    %10 = vector.extract_strided_slice %2 {offsets = [1, 0], sizes = [1, 24], strides = [1, 1]} : vector<8x24xi32> to vector<1x24xi32>
    %11 = vector.broadcast %10 : vector<1x24xi32> to vector<32x24xi32>
    %12 = arith.cmpi eq, %11, %3 : vector<32x24xi32>
    %13 = arith.extui %12 : vector<32x24xi1> to vector<32x24xi32>
    %14 = arith.sitofp %13 : vector<32x24xi32> to vector<32x24xf32>
    %cst_4 = arith.constant dense<0.000000e+00> : vector<128x24xf32>
    %15 = tpu.matmul %0, %14, %cst_4 {dimension_numbers = #tpu.dot_dimension_numbers<[1], [0], [0], [1], [0, 0, 1, 1], [], []>} : vector<128x32xf32>, vector<32x24xf32>, vector<128x24xf32> -> vector<128x24xf32>
    %16 = arith.maximumf %9, %15 : vector<128x24xf32>
    %17 = vector.extract_strided_slice %2 {offsets = [2, 0], sizes = [1, 24], strides = [1, 1]} : vector<8x24xi32> to vector<1x24xi32>
    %18 = vector.broadcast %17 : vector<1x24xi32> to vector<32x24xi32>
    %19 = arith.cmpi eq, %18, %3 : vector<32x24xi32>
    %20 = arith.extui %19 : vector<32x24xi1> to vector<32x24xi32>
    %21 = arith.sitofp %20 : vector<32x24xi32> to vector<32x24xf32>
    %cst_5 = arith.constant dense<0.000000e+00> : vector<128x24xf32>
    %22 = tpu.matmul %0, %21, %cst_5 {dimension_numbers = #tpu.dot_dimension_numbers<[1], [0], [0], [1], [0, 0, 1, 1], [], []>} : vector<128x32xf32>, vector<32x24xf32>, vector<128x24xf32> -> vector<128x24xf32>
    %23 = arith.maximumf %16, %22 : vector<128x24xf32>
    %24 = vector.extract_strided_slice %2 {offsets = [3, 0], sizes = [1, 24], strides = [1, 1]} : vector<8x24xi32> to vector<1x24xi32>
    %25 = vector.broadcast %24 : vector<1x24xi32> to vector<32x24xi32>
    %26 = arith.cmpi eq, %25, %3 : vector<32x24xi32>
    %27 = arith.extui %26 : vector<32x24xi1> to vector<32x24xi32>
    %28 = arith.sitofp %27 : vector<32x24xi32> to vector<32x24xf32>
    %cst_6 = arith.constant dense<0.000000e+00> : vector<128x24xf32>
    %29 = tpu.matmul %0, %28, %cst_6 {dimension_numbers = #tpu.dot_dimension_numbers<[1], [0], [0], [1], [0, 0, 1, 1], [], []>} : vector<128x32xf32>, vector<32x24xf32>, vector<128x24xf32> -> vector<128x24xf32>
    %30 = arith.maximumf %23, %29 : vector<128x24xf32>
    %31 = vector.extract_strided_slice %2 {offsets = [4, 0], sizes = [1, 24], strides = [1, 1]} : vector<8x24xi32> to vector<1x24xi32>
    %32 = vector.broadcast %31 : vector<1x24xi32> to vector<32x24xi32>
    %33 = arith.cmpi eq, %32, %3 : vector<32x24xi32>
    %34 = arith.extui %33 : vector<32x24xi1> to vector<32x24xi32>
    %35 = arith.sitofp %34 : vector<32x24xi32> to vector<32x24xf32>
    %cst_7 = arith.constant dense<0.000000e+00> : vector<128x24xf32>
    %36 = tpu.matmul %0, %35, %cst_7 {dimension_numbers = #tpu.dot_dimension_numbers<[1], [0], [0], [1], [0, 0, 1, 1], [], []>} : vector<128x32xf32>, vector<32x24xf32>, vector<128x24xf32> -> vector<128x24xf32>
    %37 = arith.maximumf %30, %36 : vector<128x24xf32>
    %38 = vector.extract_strided_slice %2 {offsets = [5, 0], sizes = [1, 24], strides = [1, 1]} : vector<8x24xi32> to vector<1x24xi32>
    %39 = vector.broadcast %38 : vector<1x24xi32> to vector<32x24xi32>
    %40 = arith.cmpi eq, %39, %3 : vector<32x24xi32>
    %41 = arith.extui %40 : vector<32x24xi1> to vector<32x24xi32>
    %42 = arith.sitofp %41 : vector<32x24xi32> to vector<32x24xf32>
    %cst_8 = arith.constant dense<0.000000e+00> : vector<128x24xf32>
    %43 = tpu.matmul %0, %42, %cst_8 {dimension_numbers = #tpu.dot_dimension_numbers<[1], [0], [0], [1], [0, 0, 1, 1], [], []>} : vector<128x32xf32>, vector<32x24xf32>, vector<128x24xf32> -> vector<128x24xf32>
    %44 = arith.maximumf %37, %43 : vector<128x24xf32>
    %45 = vector.extract_strided_slice %2 {offsets = [6, 0], sizes = [1, 24], strides = [1, 1]} : vector<8x24xi32> to vector<1x24xi32>
    %46 = vector.broadcast %45 : vector<1x24xi32> to vector<32x24xi32>
    %47 = arith.cmpi eq, %46, %3 : vector<32x24xi32>
    %48 = arith.extui %47 : vector<32x24xi1> to vector<32x24xi32>
    %49 = arith.sitofp %48 : vector<32x24xi32> to vector<32x24xf32>
    %cst_9 = arith.constant dense<0.000000e+00> : vector<128x24xf32>
    %50 = tpu.matmul %0, %49, %cst_9 {dimension_numbers = #tpu.dot_dimension_numbers<[1], [0], [0], [1], [0, 0, 1, 1], [], []>} : vector<128x32xf32>, vector<32x24xf32>, vector<128x24xf32> -> vector<128x24xf32>
    %51 = arith.maximumf %44, %50 : vector<128x24xf32>
    %52 = vector.extract_strided_slice %2 {offsets = [7, 0], sizes = [1, 24], strides = [1, 1]} : vector<8x24xi32> to vector<1x24xi32>
    %53 = vector.broadcast %52 : vector<1x24xi32> to vector<32x24xi32>
    %54 = arith.cmpi eq, %53, %3 : vector<32x24xi32>
    %55 = arith.extui %54 : vector<32x24xi1> to vector<32x24xi32>
    %56 = arith.sitofp %55 : vector<32x24xi32> to vector<32x24xf32>
    %cst_10 = arith.constant dense<0.000000e+00> : vector<128x24xf32>
    %57 = tpu.matmul %0, %56, %cst_10 {dimension_numbers = #tpu.dot_dimension_numbers<[1], [0], [0], [1], [0, 0, 1, 1], [], []>} : vector<128x32xf32>, vector<32x24xf32>, vector<128x24xf32> -> vector<128x24xf32>
    %58 = arith.maximumf %51, %57 : vector<128x24xf32>
    %59 = vector.extract_strided_slice %58 {offsets = [0, 0], sizes = [128, 8], strides = [1, 1]} : vector<128x24xf32> to vector<128x8xf32>
    %60 = vector.extract_strided_slice %58 {offsets = [0, 8], sizes = [128, 8], strides = [1, 1]} : vector<128x24xf32> to vector<128x8xf32>
    %61 = vector.extract_strided_slice %58 {offsets = [0, 16], sizes = [128, 8], strides = [1, 1]} : vector<128x24xf32> to vector<128x8xf32>
    %62 = arith.mulf %59, %59 : vector<128x8xf32>
    %cst_11 = arith.constant dense<0.000000e+00> : vector<8xf32>
    %63 = vector.multi_reduction <add>, %62, %cst_11 [0] : vector<128x8xf32> to vector<8xf32>
    %64 = vector.shape_cast %63 : vector<8xf32> to vector<1x8xf32>
    %cst_12 = arith.constant 1.000000e-16 : f32
    %65 = vector.broadcast %cst_12 : f32 to vector<1x8xf32>
    %66 = arith.maximumf %64, %65 : vector<1x8xf32>
    %67 = math.rsqrt %66 : vector<1x8xf32>
    %68 = arith.mulf %60, %60 : vector<128x8xf32>
    %cst_13 = arith.constant dense<0.000000e+00> : vector<8xf32>
    %69 = vector.multi_reduction <add>, %68, %cst_13 [0] : vector<128x8xf32> to vector<8xf32>
    %70 = vector.shape_cast %69 : vector<8xf32> to vector<1x8xf32>
    %cst_14 = arith.constant 1.000000e-16 : f32
    %71 = vector.broadcast %cst_14 : f32 to vector<1x8xf32>
    %72 = arith.maximumf %70, %71 : vector<1x8xf32>
    %73 = math.rsqrt %72 : vector<1x8xf32>
    %74 = arith.mulf %61, %61 : vector<128x8xf32>
    %cst_15 = arith.constant dense<0.000000e+00> : vector<8xf32>
    %75 = vector.multi_reduction <add>, %74, %cst_15 [0] : vector<128x8xf32> to vector<8xf32>
    %76 = vector.shape_cast %75 : vector<8xf32> to vector<1x8xf32>
    %cst_16 = arith.constant 1.000000e-16 : f32
    %77 = vector.broadcast %cst_16 : f32 to vector<1x8xf32>
    %78 = arith.maximumf %76, %77 : vector<1x8xf32>
    %79 = math.rsqrt %78 : vector<1x8xf32>
    %80 = arith.mulf %59, %60 : vector<128x8xf32>
    %cst_17 = arith.constant dense<0.000000e+00> : vector<8xf32>
    %81 = vector.multi_reduction <add>, %80, %cst_17 [0] : vector<128x8xf32> to vector<8xf32>
    %82 = vector.shape_cast %81 : vector<8xf32> to vector<1x8xf32>
    %83 = arith.mulf %82, %67 : vector<1x8xf32>
    %84 = arith.mulf %83, %73 : vector<1x8xf32>
    %cst_18 = arith.constant 1.000000e+00 : f32
    %85 = vector.broadcast %cst_18 : f32 to vector<1x8xf32>
    %86 = arith.subf %85, %84 : vector<1x8xf32>
    %87 = arith.mulf %59, %61 : vector<128x8xf32>
    %cst_19 = arith.constant dense<0.000000e+00> : vector<8xf32>
    %88 = vector.multi_reduction <add>, %87, %cst_19 [0] : vector<128x8xf32> to vector<8xf32>
    %89 = vector.shape_cast %88 : vector<8xf32> to vector<1x8xf32>
    %90 = arith.mulf %89, %67 : vector<1x8xf32>
    %91 = arith.mulf %90, %79 : vector<1x8xf32>
    %cst_20 = arith.constant 1.000000e+00 : f32
    %92 = vector.broadcast %cst_20 : f32 to vector<1x8xf32>
    %93 = arith.subf %92, %91 : vector<1x8xf32>
    %c0_21 = arith.constant 0 : index
    %c0_22 = arith.constant 0 : index
    %94 = vector.load %arg3[%c0_21, %c0_22] : memref<2x8xf32, #tpu.memory_space<vmem>>, vector<1x8xf32>
    tpu.vector_store %arg3[%c0_21, %c0_22], %86 {strides = array<i32>} : memref<2x8xf32, #tpu.memory_space<vmem>>, vector<1x8xf32>,
    %c1 = arith.constant 1 : index
    %c0_23 = arith.constant 0 : index
    %95 = vector.load %arg3[%c1, %c0_23] : memref<2x8xf32, #tpu.memory_space<vmem>>, vector<1x8xf32>
    tpu.vector_store %arg3[%c1, %c0_23], %93 {strides = array<i32>} : memref<2x8xf32, #tpu.memory_space<vmem>>, vector<1x8xf32>,
    return
  }
  func.func @transform_0(%arg0: i32) -> (i32, i32, i32) {
    %c0_i32 = arith.constant 0 : i32
    %c0_i32_0 = arith.constant 0 : i32
    %c0_i32_1 = arith.constant 0 : i32
    return %arg0, %c0_i32, %c0_i32_0 : i32, i32, i32
  }
  func.func @transform_1(%arg0: i32) -> (i32, i32) {
    %c0_i32 = arith.constant 0 : i32
    %c0_i32_0 = arith.constant 0 : i32
    %c0_i32_1 = arith.constant 0 : i32
    return %c0_i32, %c0_i32_0 : i32, i32
  }
  func.func @transform_2(%arg0: i32) -> (i32, i32) {
    %c0_i32 = arith.constant 0 : i32
    %c0_i32_0 = arith.constant 0 : i32
    return %c0_i32, %arg0 : i32, i32
  }
}

</mosaic_0001>

<llo_original>
// kernel: tpu_custom_call.1
$region0: #{tpu_custom_call.1}
  #allocation0 [shape = 'u32[]', space=smem, size = 0x4, offset = 0x4, fixed_abs, tag = 'smem constant byte address 0x4 - core index']
  #allocation1 [shape = 'u32[144,128]{1,0:T(1,128)}', space=vmem, size = 0x12000, scoped, tag = 'internal scratch']
  %s0 = inlined_call_operand.vmem [shape: s32[1,8,24], index: 0, kind: input, shape index: {}]
  %s1 = inlined_call_operand.vmem [shape: f32[128,32], index: 1, kind: input, shape index: {}]
  %s2 = inlined_call_operand.hbm [shape: f32[2,8], index: 2, kind: output, shape index: {}]
  %s3 = sld [smem:[#allocation0]]
  $region18: #{tpu_custom_call.1} parent=0
    _
  %s5 = ssub.s32 1, %s3
  %s6 = scalar_select 0, %s5, %s3
  $region1: #{tpu_custom_call.1} parent=0
    #allocation2 [shape = 'u8[1024]{0}', space=vmem, size = 0x400, scoped, tag = 'output window, operand 0, single buffered']
    #allocation3 [shape = 's32[1]{0}', space=sflag, size = 0x4, scoped, tag = 'scoped memory for tpu_custom_call.1']
    %7 = vsyncpa [#allocation3], 0
    // Predicated region
    $region2: #{tpu_custom_call.1} parent=1 // pred_check
      _
    $region3: #{tpu_custom_call.1} parent=1 // pred_check_branch
      %9 = sbr.rel (0) target = $region5
    $region4: #{tpu_custom_call.1} parent=1 // pred_region
      _
    $region5: #{tpu_custom_call.1} parent=1 // pred_fallthru
      _
    // Predicated region
    $region6: #{tpu_custom_call.1} parent=1 // pred_check
      _
    $region7: #{tpu_custom_call.1} parent=1 // pred_check_branch
      %11 = sbr.rel (0) target = $region9
    $region8: #{tpu_custom_call.1} parent=1 // pred_region
      _
    $region9: #{tpu_custom_call.1} parent=1 // pred_fallthru
      _
    %v12 = vld [vmem:[%s1] sm:$0xff]
    %v13 = vld [vmem:[%s1 + $0x8] sm:$0xff]
    %v14 = vld [vmem:[%s1 + $0x10] sm:$0xff]
    %v15 = vld [vmem:[%s1 + $0x18] sm:$0xff]
    %v16 = vld [vmem:[%s1 + $0x20] sm:$0xff]
    %v17 = vld [vmem:[%s1 + $0x28] sm:$0xff]
    %v18 = vld [vmem:[%s1 + $0x30] sm:$0xff]
    %v19 = vld [vmem:[%s1 + $0x38] sm:$0xff]
    %v20 = vld [vmem:[%s1 + $0x40] sm:$0xff]
    %v21 = vld [vmem:[%s1 + $0x48] sm:$0xff]
    %v22 = vld [vmem:[%s1 + $0x50] sm:$0xff]
    %v23 = vld [vmem:[%s1 + $0x58] sm:$0xff]
    %v24 = vld [vmem:[%s1 + $0x60] sm:$0xff]
    %v25 = vld [vmem:[%s1 + $0x68] sm:$0xff]
    %v26 = vld [vmem:[%s1 + $0x70] sm:$0xff]
    %v27 = vld [vmem:[%s1 + $0x78] sm:$0xff]
    %v28 = vld [vmem:[%s0] sm:$0xff]
    %v29 = vlaneseq
    %v30 = vshrl.u32 %v29, 7
    %v31 = vadd.s32 %v30, 8
    %v32 = vadd.s32 %v30, 16
    %v33 = vadd.s32 %v30, 24
    %v34 = vlaneseq
    %v35 = vshrl.u32 %v34, 7
    %v36 = vsub.s32 0, %v35
    %v37 = vrot.slane %v28, %v36
    %vm38 = vcmp.eq.s32.totalorder %v37, %v30
    %vm39 = vcmp.eq.s32.totalorder %v37, %v31
    %vm40 = vcmp.eq.s32.totalorder %v37, %v32
    %vm41 = vcmp.eq.s32.totalorder %v37, %v33
    %v42 = vsel %vm38, 1, 0
    %v43 = vsel %vm39, 1, 0
    %v44 = vsel %vm40, 1, 0
    %v45 = vsel %vm41, 1, 0
    %v46 = vcvt.s32.f32 %v42
    %v47 = vcvt.s32.f32 %v43
    %v48 = vcvt.s32.f32 %v44
    %v49 = vcvt.s32.f32 %v45
    %vm50 = vcmask 261120
    %v52 = vsel %vm50, %v12, 0
    %v55 = vsel %vm50, %v13, 0
    %v58 = vsel %vm50, %v14, 0
    %v61 = vsel %vm50, %v15, 0
    %v64 = vsel %vm50, %v16, 0
    %v67 = vsel %vm50, %v17, 0
    %v70 = vsel %vm50, %v18, 0
    %v73 = vsel %vm50, %v19, 0
    %v76 = vsel %vm50, %v20, 0
    %v79 = vsel %vm50, %v21, 0
    %v82 = vsel %vm50, %v22, 0
    %v85 = vsel %vm50, %v23, 0
    %v88 = vsel %vm50, %v24, 0
    %v91 = vsel %vm50, %v25, 0
    %v94 = vsel %vm50, %v26, 0
    %v97 = vsel %vm50, %v27, 0
    %99 = vmatprep.subr.mxu0 0.0
    %100 = vmatpush1.msra.mxu0 %v46
    %101 = vmatprep.subr.mxu0 0.0
    %102 = vmatpush1.msra.mxu0 %v47
    %103 = vmatprep.subr.mxu0 0.0
    %104 = vmatpush1.msra.mxu0 %v48
    %105 = vmatprep.subr.mxu0 0.0
    %106 = vmatpush1.msra.mxu0 %v49
    %107 = vmatprep.subr.mxu0 0.0
    %108 = vmatpush1.msra.mxu0 0.0
    %109 = vmatprep.subr.mxu0 0.0
    %110 = vmatpush1.msra.mxu0 0.0
    %111 = vmatprep.subr.mxu0 0.0
    %112 = vmatpush1.msra.mxu0 0.0
    %113 = vmatprep.subr.mxu0 0.0
    %114 = vmatpush1.msra.mxu0 0.0
    %115 = vmatprep.subr.mxu0 0.0
    %116 = vmatpush1.msra.mxu0 0.0
    %117 = vmatprep.subr.mxu0 0.0
    %118 = vmatpush1.msra.mxu0 0.0
    %119 = vmatprep.subr.mxu0 0.0
    %120 = vmatpush1.msra.mxu0 0.0
    %121 = vmatprep.subr.mxu0 0.0
    %122 = vmatpush1.msra.mxu0 0.0
    %123 = vmatprep.subr.mxu0 0.0
    %124 = vmatpush1.msra.mxu0 0.0
    %125 = vmatprep.subr.mxu0 0.0
    %126 = vmatpush1.msra.mxu0 0.0
    %127 = vmatprep.subr.mxu0 0.0
    %128 = vmatpush1.msra.mxu0 0.0
    %129 = vmatprep.subr.mxu0 0.0
    %130 = vmatpush1.msra.mxu0 0.0
    %131 = vmatprep.subr.mxu0 0.0
    %132 = vmatpush1.msra.mxu0 0.0
    %133 = vmatprep.subr.mxu0 0.0
    %134 = vmatpush1.msra.mxu0 0.0
    %135 = vmatprep.subr.mxu0 0.0
    %136 = vmatpush1.msra.mxu0 0.0
    %137 = vmatprep.subr.mxu0 0.0
    %138 = vmatpush1.msra.mxu0 0.0
    %139 = vmatprep.subr.mxu0 0.0
    %140 = vmatpush1.msra.mxu0 0.0
    %141 = vmatprep.subr.mxu0 0.0
    %142 = vmatpush1.msra.mxu0 0.0
    %143 = vmatprep.subr.mxu0 0.0
    %144 = vmatpush1.msra.mxu0 0.0
    %145 = vmatprep.subr.mxu0 0.0
    %146 = vmatpush1.msra.mxu0 0.0
    %147 = vmatprep.subr.mxu0 0.0
    %148 = vmatpush1.msra.mxu0 0.0
    %149 = vmatprep.subr.mxu0 0.0
    %150 = vmatpush1.msra.mxu0 0.0
    %151 = vmatprep.subr.mxu0 0.0
    %152 = vmatpush1.msra.mxu0 0.0
    %153 = vmatprep.subr.mxu0 0.0
    %154 = vmatpush1.msra.mxu0 0.0
    %155 = vmatprep.subr.mxu0 0.0
    %156 = vmatpush1.msra.mxu0 0.0
    %157 = vmatprep.subr.mxu0 0.0
    %158 = vmatpush1.msra.mxu0 0.0
    %159 = vmatprep.subr.mxu0 0.0
    %160 = vmatpush1.msra.mxu0 0.0
    %161 = vmatprep.subr.mxu0 0.0
    %162 = vmatpush1.msra.mxu0 0.0
    %163 = vmatprep.mubr.f32.mxu0 0.0
    %164 = vmatmul.mubr.f32.gmra.mrb[0].mxu0 %v52
    %v165 = vpop.f32.mrb[0].mxu0
    %v166 = vadd.f32 0.0, %v165
    %v167 = vpop.f32.mrb[0].mxu0
    %168 = vmatprep.mubr.f32.mxu0 0.0
    %169 = vmatmul.mubr.f32.gmra.mrb[0].mxu0 %v55
    %v170 = vpop.f32.mrb[0].mxu0
    %v171 = vadd.f32 0.0, %v170
    %v172 = vpop.f32.mrb[0].mxu0
    %173 = vmatprep.mubr.f32.mxu0 0.0
    %174 = vmatmul.mubr.f32.gmra.mrb[0].mxu0 %v58
    %v175 = vpop.f32.mrb[0].mxu0
    %v176 = vadd.f32 0.0, %v175
    %v177 = vpop.f32.mrb[0].mxu0
    %178 = vmatprep.mubr.f32.mxu0 0.0
    %179 = vmatmul.mubr.f32.gmra.mrb[0].mxu0 %v61
    %v180 = vpop.f32.mrb[0].mxu0
    %v181 = vadd.f32 0.0, %v180
    %v182 = vpop.f32.mrb[0].mxu0
    %183 = vmatprep.mubr.f32.mxu0 0.0
    %184 = vmatmul.mubr.f32.gmra.mrb[0].mxu0 %v64
    %v185 = vpop.f32.mrb[0].mxu0
    %v186 = vadd.f32 0.0, %v185
    %v187 = vpop.f32.mrb[0].mxu0
    %188 = vmatprep.mubr.f32.mxu0 0.0
    %189 = vmatmul.mubr.f32.gmra.mrb[0].mxu0 %v67
    %v190 = vpop.f32.mrb[0].mxu0
    %v191 = vadd.f32 0.0, %v190
    %v192 = vpop.f32.mrb[0].mxu0
    %193 = vmatprep.mubr.f32.mxu0 0.0
    %194 = vmatmul.mubr.f32.gmra.mrb[0].mxu0 %v70
    %v195 = vpop.f32.mrb[0].mxu0
    %v196 = vadd.f32 0.0, %v195
    %v197 = vpop.f32.mrb[0].mxu0
    %198 = vmatprep.mubr.f32.mxu0 0.0
    %199 = vmatmul.mubr.f32.gmra.mrb[0].mxu0 %v73
    %v200 = vpop.f32.mrb[0].mxu0
    %v201 = vadd.f32 0.0, %v200
    %v202 = vpop.f32.mrb[0].mxu0
    %203 = vmatprep.mubr.f32.mxu0 0.0
    %204 = vmatmul.mubr.f32.gmra.mrb[0].mxu0 %v76
    %v205 = vpop.f32.mrb[0].mxu0
    %v206 = vadd.f32 0.0, %v205
    %v207 = vpop.f32.mrb[0].mxu0
    %208 = vmatprep.mubr.f32.mxu0 0.0
    %209 = vmatmul.mubr.f32.gmra.mrb[0].mxu0 %v79
    %v210 = vpop.f32.mrb[0].mxu0
    %v211 = vadd.f32 0.0, %v210
    %v212 = vpop.f32.mrb[0].mxu0
    %213 = vmatprep.mubr.f32.mxu0 0.0
    %214 = vmatmul.mubr.f32.gmra.mrb[0].mxu0 %v82
    %v215 = vpop.f32.mrb[0].mxu0
    %v216 = vadd.f32 0.0, %v215
    %v217 = vpop.f32.mrb[0].mxu0
    %218 = vmatprep.mubr.f32.mxu0 0.0
    %219 = vmatmul.mubr.f32.gmra.mrb[0].mxu0 %v85
    %v220 = vpop.f32.mrb[0].mxu0
    %v221 = vadd.f32 0.0, %v220
    %v222 = vpop.f32.mrb[0].mxu0
    %223 = vmatprep.mubr.f32.mxu0 0.0
    %224 = vmatmul.mubr.f32.gmra.mrb[0].mxu0 %v88
    %v225 = vpop.f32.mrb[0].mxu0
    %v226 = vadd.f32 0.0, %v225
    %v227 = vpop.f32.mrb[0].mxu0
    %228 = vmatprep.mubr.f32.mxu0 0.0
    %229 = vmatmul.mubr.f32.gmra.mrb[0].mxu0 %v91
    %v230 = vpop.f32.mrb[0].mxu0
    %v231 = vadd.f32 0.0, %v230
    %v232 = vpop.f32.mrb[0].mxu0
    %233 = vmatprep.mubr.f32.mxu0 0.0
    %234 = vmatmul.mubr.f32.gmra.mrb[0].mxu0 %v94
    %v235 = vpop.f32.mrb[0].mxu0
    %v236 = vadd.f32 0.0, %v235
    %v237 = vpop.f32.mrb[0].mxu0
    %238 = vmatprep.mubr.f32.mxu0 0.0
    %239 = vmatmul.mubr.f32.gmra.mrb[0].mxu0 %v97
    %v240 = vpop.f32.mrb[0].mxu0
    %v241 = vadd.f32 0.0, %v240
    %v242 = vpop.f32.mrb[0].mxu0
    %243 = vdwg.mxu0
    %v244 = vlaneseq
    %v245 = vshrl.u32 %v244, 7
    %v246 = vsub.s32 1, %v245
    %v247 = vrot.slane %v28, %v246
    %vm248 = vcmp.eq.s32.totalorder %v247, %v30
    %vm249 = vcmp.eq.s32.totalorder %v247, %v31
    %vm250 = vcmp.eq.s32.totalorder %v247, %v32
    %vm251 = vcmp.eq.s32.totalorder %v247, %v33
    %v252 = vsel %vm248, 1, 0
    %v253 = vsel %vm249, 1, 0
    %v254 = vsel %vm250, 1, 0
    %v255 = vsel %vm251, 1, 0
    %v256 = vcvt.s32.f32 %v252
    %v257 = vcvt.s32.f32 %v253
    %v258 = vcvt.s32.f32 %v254
    %v259 = vcvt.s32.f32 %v255
    %260 = vmatprep.subr.mxu0 0.0
    %261 = vmatpush1.msra.mxu0 %v256
    %262 = vmatprep.subr.mxu0 0.0
    %263 = vmatpush1.msra.mxu0 %v257
    %264 = vmatprep.subr.mxu0 0.0
    %265 = vmatpush1.msra.mxu0 %v258
    %266 = vmatprep.subr.mxu0 0.0
    %267 = vmatpush1.msra.mxu0 %v259
    %268 = vmatprep.subr.mxu0 0.0
    %269 = vmatpush1.msra.mxu0 0.0
    %270 = vmatprep.subr.mxu0 0.0
    %271 = vmatpush1.msra.mxu0 0.0
    %272 = vmatprep.subr.mxu0 0.0
    %273 = vmatpush1.msra.mxu0 0.0
    %274 = vmatprep.subr.mxu0 0.0
    %275 = vmatpush1.msra.mxu0 0.0
    %276 = vmatprep.subr.mxu0 0.0
    %277 = vmatpush1.msra.mxu0 0.0
    %278 = vmatprep.subr.mxu0 0.0
    %279 = vmatpush1.msra.mxu0 0.0
    %280 = vmatprep.subr.mxu0 0.0
    %281 = vmatpush1.msra.mxu0 0.0
    %282 = vmatprep.subr.mxu0 0.0
    %283 = vmatpush1.msra.mxu0 0.0
    %284 = vmatprep.subr.mxu0 0.0
    %285 = vmatpush1.msra.mxu0 0.0
    %286 = vmatprep.subr.mxu0 0.0
    %287 = vmatpush1.msra.mxu0 0.0
    %288 = vmatprep.subr.mxu0 0.0
    %289 = vmatpush1.msra.mxu0 0.0
    %290 = vmatprep.subr.mxu0 0.0
    %291 = vmatpush1.msra.mxu0 0.0
    %292 = vmatprep.subr.mxu0 0.0
    %293 = vmatpush1.msra.mxu0 0.0
    %294 = vmatprep.subr.mxu0 0.0
    %295 = vmatpush1.msra.mxu0 0.0
    %296 = vmatprep.subr.mxu0 0.0
    %297 = vmatpush1.msra.mxu0 0.0
    %298 = vmatprep.subr.mxu0 0.0
    %299 = vmatpush1.msra.mxu0 0.0
    %300 = vmatprep.subr.mxu0 0.0
    %301 = vmatpush1.msra.mxu0 0.0
    %302 = vmatprep.subr.mxu0 0.0
    %303 = vmatpush1.msra.mxu0 0.0
    %304 = vmatprep.subr.mxu0 0.0
    %305 = vmatpush1.msra.mxu0 0.0
    %306 = vmatprep.subr.mxu0 0.0
    %307 = vmatpush1.msra.mxu0 0.0
    %308 = vmatprep.subr.mxu0 0.0
    %309 = vmatpush1.msra.mxu0 0.0
    %310 = vmatprep.subr.mxu0 0.0
    %311 = vmatpush1.msra.mxu0 0.0
    %312 = vmatprep.subr.mxu0 0.0
    %313 = vmatpush1.msra.mxu0 0.0
    %314 = vmatprep.subr.mxu0 0.0
    %315 = vmatpush1.msra.mxu0 0.0
    %316 = vmatprep.subr.mxu0 0.0
    %317 = vmatpush1.msra.mxu0 0.0
    %318 = vmatprep.subr.mxu0 0.0
    %319 = vmatpush1.msra.mxu0 0.0
    %320 = vmatprep.subr.mxu0 0.0
    %321 = vmatpush1.msra.mxu0 0.0
    %322 = vmatprep.subr.mxu0 0.0
    %323 = vmatpush1.msra.mxu0 0.0
    %324 = vmatprep.mubr.f32.mxu0 0.0
    %325 = vmatmul.mubr.f32.gmra.mrb[0].mxu0 %v52
    %v326 = vpop.f32.mrb[0].mxu0
    %v327 = vadd.f32 0.0, %v326
    %v328 = vpop.f32.mrb[0].mxu0
    %329 = vmatprep.mubr.f32.mxu0 0.0
    %330 = vmatmul.mubr.f32.gmra.mrb[0].mxu0 %v55
    %v331 = vpop.f32.mrb[0].mxu0
    %v332 = vadd.f32 0.0, %v331
    %v333 = vpop.f32.mrb[0].mxu0
    %334 = vmatprep.mubr.f32.mxu0 0.0
    %335 = vmatmul.mubr.f32.gmra.mrb[0].mxu0 %v58
    %v336 = vpop.f32.mrb[0].mxu0
    %v337 = vadd.f32 0.0, %v336
    %v338 = vpop.f32.mrb[0].mxu0
    %339 = vmatprep.mubr.f32.mxu0 0.0
    %340 = vmatmul.mubr.f32.gmra.mrb[0].mxu0 %v61
    %v341 = vpop.f32.mrb[0].mxu0
    %v342 = vadd.f32 0.0, %v341
    %v343 = vpop.f32.mrb[0].mxu0
    %344 = vmatprep.mubr.f32.mxu0 0.0
    %345 = vmatmul.mubr.f32.gmra.mrb[0].mxu0 %v64
    %v346 = vpop.f32.mrb[0].mxu0
    %v347 = vadd.f32 0.0, %v346
    %v348 = vpop.f32.mrb[0].mxu0
    %349 = vmatprep.mubr.f32.mxu0 0.0
    %350 = vmatmul.mubr.f32.gmra.mrb[0].mxu0 %v67
    %v351 = vpop.f32.mrb[0].mxu0
    %v352 = vadd.f32 0.0, %v351
    %v353 = vpop.f32.mrb[0].mxu0
    %354 = vmatprep.mubr.f32.mxu0 0.0
    %355 = vmatmul.mubr.f32.gmra.mrb[0].mxu0 %v70
    %v356 = vpop.f32.mrb[0].mxu0
    %v357 = vadd.f32 0.0, %v356
    %v358 = vpop.f32.mrb[0].mxu0
    %359 = vmatprep.mubr.f32.mxu0 0.0
    %360 = vmatmul.mubr.f32.gmra.mrb[0].mxu0 %v73
    %v361 = vpop.f32.mrb[0].mxu0
    %v362 = vadd.f32 0.0, %v361
    %v363 = vpop.f32.mrb[0].mxu0
    %364 = vmatprep.mubr.f32.mxu0 0.0
    %365 = vmatmul.mubr.f32.gmra.mrb[0].mxu0 %v76
    %v366 = vpop.f32.mrb[0].mxu0
    %v367 = vadd.f32 0.0, %v366
    %v368 = vpop.f32.mrb[0].mxu0
    %369 = vmatprep.mubr.f32.mxu0 0.0
    %370 = vmatmul.mubr.f32.gmra.mrb[0].mxu0 %v79
    %v371 = vpop.f32.mrb[0].mxu0
    %v372 = vadd.f32 0.0, %v371
    %v373 = vpop.f32.mrb[0].mxu0
    %374 = vmatprep.mubr.f32.mxu0 0.0
    %375 = vmatmul.mubr.f32.gmra.mrb[0].mxu0 %v82
    %v376 = vpop.f32.mrb[0].mxu0
    %v377 = vadd.f32 0.0, %v376
    %v378 = vpop.f32.mrb[0].mxu0
    %379 = vmatprep.mubr.f32.mxu0 0.0
    %380 = vmatmul.mubr.f32.gmra.mrb[0].mxu0 %v85
    %v381 = vpop.f32.mrb[0].mxu0
    %v382 = vadd.f32 0.0, %v381
    %v383 = vpop.f32.mrb[0].mxu0
    %384 = vmatprep.mubr.f32.mxu0 0.0
    %385 = vmatmul.mubr.f32.gmra.mrb[0].mxu0 %v88
    %v386 = vpop.f32.mrb[0].mxu0
    %v387 = vadd.f32 0.0, %v386
    %v388 = vpop.f32.mrb[0].mxu0
    %389 = vmatprep.mubr.f32.mxu0 0.0
    %390 = vmatmul.mubr.f32.gmra.mrb[0].mxu0 %v91
    %v391 = vpop.f32.mrb[0].mxu0
    %v392 = vadd.f32 0.0, %v391
    %v393 = vpop.f32.mrb[0].mxu0
    %394 = vmatprep.mubr.f32.mxu0 0.0
    %395 = vmatmul.mubr.f32.gmra.mrb[0].mxu0 %v94
    %v396 = vpop.f32.mrb[0].mxu0
    %v397 = vadd.f32 0.0, %v396
    %v398 = vpop.f32.mrb[0].mxu0
    %399 = vmatprep.mubr.f32.mxu0 0.0
    %400 = vmatmul.mubr.f32.gmra.mrb[0].mxu0 %v97
    %v401 = vpop.f32.mrb[0].mxu0
    %v402 = vadd.f32 0.0, %v401
    %v403 = vpop.f32.mrb[0].mxu0
    %404 = vdwg.mxu0
    %v405 = vmax.f32 %v166, %v327
    %v406 = vmax.f32 %v171, %v332
    %v407 = vmax.f32 %v176, %v337
    %v408 = vmax.f32 %v181, %v342
    %v409 = vmax.f32 %v186, %v347
    %v410 = vmax.f32 %v191, %v352
    %v411 = vmax.f32 %v196, %v357
    %v412 = vmax.f32 %v201, %v362
    %v413 = vmax.f32 %v206, %v367
    %v414 = vmax.f32 %v211, %v372
    %v415 = vmax.f32 %v216, %v377
    %v416 = vmax.f32 %v221, %v382
    %v417 = vmax.f32 %v226, %v387
    %v418 = vmax.f32 %v231, %v392
    %v419 = vmax.f32 %v236, %v397
    %v420 = vmax.f32 %v241, %v402
    %v421 = vlaneseq
    %v422 = vshrl.u32 %v421, 7
    %v423 = vsub.s32 2, %v422
    %v424 = vrot.slane %v28, %v423
    %vm425 = vcmp.eq.s32.totalorder %v424, %v30
    %vm426 = vcmp.eq.s32.totalorder %v424, %v31
    %vm427 = vcmp.eq.s32.totalorder %v424, %v32
    %vm428 = vcmp.eq.s32.totalorder %v424, %v33
    %v429 = vsel %vm425, 1, 0
    %v430 = vsel %vm426, 1, 0
    %v431 = vsel %vm427, 1, 0
    %v432 = vsel %vm428, 1, 0
    %v433 = vcvt.s32.f32 %v429
    %v434 = vcvt.s32.f32 %v430
    %v435 = vcvt.s32.f32 %v431
    %v436 = vcvt.s32.f32 %v432
    %437 = vmatprep.subr.mxu0 0.0
    %438 = vmatpush1.msra.mxu0 %v433
    %439 = vmatprep.subr.mxu0 0.0
    %440 = vmatpush1.msra.mxu0 %v434
    %441 = vmatprep.subr.mxu0 0.0
    %442 = vmatpush1.msra.mxu0 %v435
    %443 = vmatprep.subr.mxu0 0.0
    %444 = vmatpush1.msra.mxu0 %v436
    %445 = vmatprep.subr.mxu0 0.0
    %446 = vmatpush1.msra.mxu0 0.0
    %447 = vmatprep.subr.mxu0 0.0
    %448 = vmatpush1.msra.mxu0 0.0
    %449 = vmatprep.subr.mxu0 0.0
    %450 = vmatpush1.msra.mxu0 0.0
    %451 = vmatprep.subr.mxu0 0.0
    %452 = vmatpush1.msra.mxu0 0.0
    %453 = vmatprep.subr.mxu0 0.0
    %454 = vmatpush1.msra.mxu0 0.0
    %455 = vmatprep.subr.mxu0 0.0
    %456 = vmatpush1.msra.mxu0 0.0
    %457 = vmatprep.subr.mxu0 0.0
    %458 = vmatpush1.msra.mxu0 0.0
    %459 = vmatprep.subr.mxu0 0.0
    %460 = vmatpush1.msra.mxu0 0.0
    %461 = vmatprep.subr.mxu0 0.0
    %462 = vmatpush1.msra.mxu0 0.0
    %463 = vmatprep.subr.mxu0 0.0
    %464 = vmatpush1.msra.mxu0 0.0
    %465 = vmatprep.subr.mxu0 0.0
    %466 = vmatpush1.msra.mxu0 0.0
    %467 = vmatprep.subr.mxu0 0.0
    %468 = vmatpush1.msra.mxu0 0.0
    %469 = vmatprep.subr.mxu0 0.0
    %470 = vmatpush1.msra.mxu0 0.0
    %471 = vmatprep.subr.mxu0 0.0
    %472 = vmatpush1.msra.mxu0 0.0
    %473 = vmatprep.subr.mxu0 0.0
    %474 = vmatpush1.msra.mxu0 0.0
    %475 = vmatprep.subr.mxu0 0.0
    %476 = vmatpush1.msra.mxu0 0.0
    %477 = vmatprep.subr.mxu0 0.0
    %478 = vmatpush1.msra.mxu0 0.0
    %479 = vmatprep.subr.mxu0 0.0
    %480 = vmatpush1.msra.mxu0 0.0
    %481 = vmatprep.subr.mxu0 0.0
    %482 = vmatpush1.msra.mxu0 0.0
    %483 = vmatprep.subr.mxu0 0.0
    %484 = vmatpush1.msra.mxu0 0.0
    %485 = vmatprep.subr.mxu0 0.0
    %486 = vmatpush1.msra.mxu0 0.0
    %487 = vmatprep.subr.mxu0 0.0
    %488 = vmatpush1.msra.mxu0 0.0
    %489 = vmatprep.subr.mxu0 0.0
    %490 = vmatpush1.msra.mxu0 0.0
    %491 = vmatprep.subr.mxu0 0.0
    %492 = vmatpush1.msra.mxu0 0.0
    %493 = vmatprep.subr.mxu0 0.0
    %494 = vmatpush1.msra.mxu0 0.0
    %495 = vmatprep.subr.mxu0 0.0
    %496 = vmatpush1.msra.mxu0 0.0
    %497 = vmatprep.subr.mxu0 0.0
    %498 = vmatpush1.msra.mxu0 0.0
    %499 = vmatprep.subr.mxu0 0.0
    %500 = vmatpush1.msra.mxu0 0.0
    %501 = vmatprep.mubr.f32.mxu0 0.0
    %502 = vmatmul.mubr.f32.gmra.mrb[0].mxu0 %v52
    %v503 = vpop.f32.mrb[0].mxu0
    %v504 = vadd.f32 0.0, %v503
    %v505 = vpop.f32.mrb[0].mxu0
    %506 = vmatprep.mubr.f32.mxu0 0.0
    %507 = vmatmul.mubr.f32.gmra.mrb[0].mxu0 %v55
    %v508 = vpop.f32.mrb[0].mxu0
    %v509 = vadd.f32 0.0, %v508
    %v510 = vpop.f32.mrb[0].mxu0
    %511 = vmatprep.mubr.f32.mxu0 0.0
    %512 = vmatmul.mubr.f32.gmra.mrb[0].mxu0 %v58
    %v513 = vpop.f32.mrb[0].mxu0
    %v514 = vadd.f32 0.0, %v513
    %v515 = vpop.f32.mrb[0].mxu0
    %516 = vmatprep.mubr.f32.mxu0 0.0
    %517 = vmatmul.mubr.f32.gmra.mrb[0].mxu0 %v61
    %v518 = vpop.f32.mrb[0].mxu0
    %v519 = vadd.f32 0.0, %v518
    %v520 = vpop.f32.mrb[0].mxu0
    %521 = vmatprep.mubr.f32.mxu0 0.0
    %522 = vmatmul.mubr.f32.gmra.mrb[0].mxu0 %v64
    %v523 = vpop.f32.mrb[0].mxu0
    %v524 = vadd.f32 0.0, %v523
    %v525 = vpop.f32.mrb[0].mxu0
    %526 = vmatprep.mubr.f32.mxu0 0.0
    %527 = vmatmul.mubr.f32.gmra.mrb[0].mxu0 %v67
    %v528 = vpop.f32.mrb[0].mxu0
    %v529 = vadd.f32 0.0, %v528
    %v530 = vpop.f32.mrb[0].mxu0
    %531 = vmatprep.mubr.f32.mxu0 0.0
    %532 = vmatmul.mubr.f32.gmra.mrb[0].mxu0 %v70
    %v533 = vpop.f32.mrb[0].mxu0
    %v534 = vadd.f32 0.0, %v533
    %v535 = vpop.f32.mrb[0].mxu0
    %536 = vmatprep.mubr.f32.mxu0 0.0
    %537 = vmatmul.mubr.f32.gmra.mrb[0].mxu0 %v73
    %v538 = vpop.f32.mrb[0].mxu0
    %v539 = vadd.f32 0.0, %v538
    %v540 = vpop.f32.mrb[0].mxu0
    %541 = vmatprep.mubr.f32.mxu0 0.0
    %542 = vmatmul.mubr.f32.gmra.mrb[0].mxu0 %v76
    %v543 = vpop.f32.mrb[0].mxu0
    %v544 = vadd.f32 0.0, %v543
    %v545 = vpop.f32.mrb[0].mxu0
    %546 = vmatprep.mubr.f32.mxu0 0.0
    %547 = vmatmul.mubr.f32.gmra.mrb[0].mxu0 %v79
    %v548 = vpop.f32.mrb[0].mxu0
    %v549 = vadd.f32 0.0, %v548
    %v550 = vpop.f32.mrb[0].mxu0
    %551 = vmatprep.mubr.f32.mxu0 0.0
    %552 = vmatmul.mubr.f32.gmra.mrb[0].mxu0 %v82
    %v553 = vpop.f32.mrb[0].mxu0
    %v554 = vadd.f32 0.0, %v553
    %v555 = vpop.f32.mrb[0].mxu0
    %556 = vmatprep.mubr.f32.mxu0 0.0
    %557 = vmatmul.mubr.f32.gmra.mrb[0].mxu0 %v85
    %v558 = vpop.f32.mrb[0].mxu0
    %v559 = vadd.f32 0.0, %v558
    %v560 = vpop.f32.mrb[0].mxu0
    %561 = vmatprep.mubr.f32.mxu0 0.0
    %562 = vmatmul.mubr.f32.gmra.mrb[0].mxu0 %v88
    %v563 = vpop.f32.mrb[0].mxu0
    %v564 = vadd.f32 0.0, %v563
    %v565 = vpop.f32.mrb[0].mxu0
    %566 = vmatprep.mubr.f32.mxu0 0.0
    %567 = vmatmul.mubr.f32.gmra.mrb[0].mxu0 %v91
    %v568 = vpop.f32.mrb[0].mxu0
    %v569 = vadd.f32 0.0, %v568
    %v570 = vpop.f32.mrb[0].mxu0
    %571 = vmatprep.mubr.f32.mxu0 0.0
    %572 = vmatmul.mubr.f32.gmra.mrb[0].mxu0 %v94
    %v573 = vpop.f32.mrb[0].mxu0
    %v574 = vadd.f32 0.0, %v573
    %v575 = vpop.f32.mrb[0].mxu0
    %576 = vmatprep.mubr.f32.mxu0 0.0
    %577 = vmatmul.mubr.f32.gmra.mrb[0].mxu0 %v97
    %v578 = vpop.f32.mrb[0].mxu0
    %v579 = vadd.f32 0.0, %v578
    %v580 = vpop.f32.mrb[0].mxu0
    %581 = vdwg.mxu0
    %v582 = vmax.f32 %v405, %v504
    %v583 = vmax.f32 %v406, %v509
    %v584 = vmax.f32 %v407, %v514
    %v585 = vmax.f32 %v408, %v519
    %v586 = vmax.f32 %v409, %v524
    %v587 = vmax.f32 %v410, %v529
    %v588 = vmax.f32 %v411, %v534
    %v589 = vmax.f32 %v412, %v539
    %v590 = vmax.f32 %v413, %v544
    %v591 = vmax.f32 %v414, %v549
    %v592 = vmax.f32 %v415, %v554
    %v593 = vmax.f32 %v416, %v559
    %v594 = vmax.f32 %v417, %v564
    %v595 = vmax.f32 %v418, %v569
    %v596 = vmax.f32 %v419, %v574
    %v597 = vmax.f32 %v420, %v579
    %v598 = vlaneseq
    %v599 = vshrl.u32 %v598, 7
    %v600 = vsub.s32 3, %v599
    %v601 = vrot.slane %v28, %v600
    %vm602 = vcmp.eq.s32.totalorder %v601, %v30
    %vm603 = vcmp.eq.s32.totalorder %v601, %v31
    %vm604 = vcmp.eq.s32.totalorder %v601, %v32
    %vm605 = vcmp.eq.s32.totalorder %v601, %v33
    %v606 = vsel %vm602, 1, 0
    %v607 = vsel %vm603, 1, 0
    %v608 = vsel %vm604, 1, 0
    %v609 = vsel %vm605, 1, 0
    %v610 = vcvt.s32.f32 %v606
    %v611 = vcvt.s32.f32 %v607
    %v612 = vcvt.s32.f32 %v608
    %v613 = vcvt.s32.f32 %v609
    %614 = vmatprep.subr.mxu0 0.0
    %615 = vmatpush1.msra.mxu0 %v610
    %616 = vmatprep.subr.mxu0 0.0
    %617 = vmatpush1.msra.mxu0 %v611
    %618 = vmatprep.subr.mxu0 0.0
    %619 = vmatpush1.msra.mxu0 %v612
    %620 = vmatprep.subr.mxu0 0.0
    %621 = vmatpush1.msra.mxu0 %v613
    %622 = vmatprep.subr.mxu0 0.0
    %623 = vmatpush1.msra.mxu0 0.0
    %624 = vmatprep.subr.mxu0 0.0
    %625 = vmatpush1.msra.mxu0 0.0
    %626 = vmatprep.subr.mxu0 0.0
    %627 = vmatpush1.msra.mxu0 0.0
    %628 = vmatprep.subr.mxu0 0.0
    %629 = vmatpush1.msra.mxu0 0.0
    %630 = vmatprep.subr.mxu0 0.0
    %631 = vmatpush1.msra.mxu0 0.0
    %632 = vmatprep.subr.mxu0 0.0
    %633 = vmatpush1.msra.mxu0 0.0
    %634 = vmatprep.subr.mxu0 0.0
    %635 = vmatpush1.msra.mxu0 0.0
    %636 = vmatprep.subr.mxu0 0.0
    %637 = vmatpush1.msra.mxu0 0.0
    %638 = vmatprep.subr.mxu0 0.0
    %639 = vmatpush1.msra.mxu0 0.0
    %640 = vmatprep.subr.mxu0 0.0
    %641 = vmatpush1.msra.mxu0 0.0
    %642 = vmatprep.subr.mxu0 0.0
    %643 = vmatpush1.msra.mxu0 0.0
    %644 = vmatprep.subr.mxu0 0.0
    %645 = vmatpush1.msra.mxu0 0.0
    %646 = vmatprep.subr.mxu0 0.0
    %647 = vmatpush1.msra.mxu0 0.0
    %648 = vmatprep.subr.mxu0 0.0
    %649 = vmatpush1.msra.mxu0 0.0
    %650 = vmatprep.subr.mxu0 0.0
    %651 = vmatpush1.msra.mxu0 0.0
    %652 = vmatprep.subr.mxu0 0.0
    %653 = vmatpush1.msra.mxu0 0.0
    %654 = vmatprep.subr.mxu0 0.0
    %655 = vmatpush1.msra.mxu0 0.0
    %656 = vmatprep.subr.mxu0 0.0
    %657 = vmatpush1.msra.mxu0 0.0
    %658 = vmatprep.subr.mxu0 0.0
    %659 = vmatpush1.msra.mxu0 0.0
    %660 = vmatprep.subr.mxu0 0.0
    %661 = vmatpush1.msra.mxu0 0.0
    %662 = vmatprep.subr.mxu0 0.0
    %663 = vmatpush1.msra.mxu0 0.0
    %664 = vmatprep.subr.mxu0 0.0
    %665 = vmatpush1.msra.mxu0 0.0
    %666 = vmatprep.subr.mxu0 0.0
    %667 = vmatpush1.msra.mxu0 0.0
    %668 = vmatprep.subr.mxu0 0.0
    %669 = vmatpush1.msra.mxu0 0.0
    %670 = vmatprep.subr.mxu0 0.0
    %671 = vmatpush1.msra.mxu0 0.0
    %672 = vmatprep.subr.mxu0 0.0
    %673 = vmatpush1.msra.mxu0 0.0
    %674 = vmatprep.subr.mxu0 0.0
    %675 = vmatpush1.msra.mxu0 0.0
    %676 = vmatprep.subr.mxu0 0.0
    %677 = vmatpush1.msra.mxu0 0.0
    %678 = vmatprep.mubr.f32.mxu0 0.0
    %679 = vmatmul.mubr.f32.gmra.mrb[0].mxu0 %v52
    %v680 = vpop.f32.mrb[0].mxu0
    %v681 = vadd.f32 0.0, %v680
    %v682 = vpop.f32.mrb[0].mxu0
    %683 = vmatprep.mubr.f32.mxu0 0.0
    %684 = vmatmul.mubr.f32.gmra.mrb[0].mxu0 %v55
    %v685 = vpop.f32.mrb[0].mxu0
    %v686 = vadd.f32 0.0, %v685
    %v687 = vpop.f32.mrb[0].mxu0
    %688 = vmatprep.mubr.f32.mxu0 0.0
    %689 = vmatmul.mubr.f32.gmra.mrb[0].mxu0 %v58
    %v690 = vpop.f32.mrb[0].mxu0
    %v691 = vadd.f32 0.0, %v690
    %v692 = vpop.f32.mrb[0].mxu0
    %693 = vmatprep.mubr.f32.mxu0 0.0
    %694 = vmatmul.mubr.f32.gmra.mrb[0].mxu0 %v61
    %v695 = vpop.f32.mrb[0].mxu0
    %v696 = vadd.f32 0.0, %v695
    %v697 = vpop.f32.mrb[0].mxu0
    %698 = vmatprep.mubr.f32.mxu0 0.0
    %699 = vmatmul.mubr.f32.gmra.mrb[0].mxu0 %v64
    %v700 = vpop.f32.mrb[0].mxu0
    %v701 = vadd.f32 0.0, %v700
    %v702 = vpop.f32.mrb[0].mxu0
    %703 = vmatprep.mubr.f32.mxu0 0.0
    %704 = vmatmul.mubr.f32.gmra.mrb[0].mxu0 %v67
    %v705 = vpop.f32.mrb[0].mxu0
    %v706 = vadd.f32 0.0, %v705
    %v707 = vpop.f32.mrb[0].mxu0
    %708 = vmatprep.mubr.f32.mxu0 0.0
    %709 = vmatmul.mubr.f32.gmra.mrb[0].mxu0 %v70
    %v710 = vpop.f32.mrb[0].mxu0
    %v711 = vadd.f32 0.0, %v710
    %v712 = vpop.f32.mrb[0].mxu0
    %713 = vmatprep.mubr.f32.mxu0 0.0
    %714 = vmatmul.mubr.f32.gmra.mrb[0].mxu0 %v73
    %v715 = vpop.f32.mrb[0].mxu0
    %v716 = vadd.f32 0.0, %v715
    %v717 = vpop.f32.mrb[0].mxu0
    %718 = vmatprep.mubr.f32.mxu0 0.0
    %719 = vmatmul.mubr.f32.gmra.mrb[0].mxu0 %v76
    %v720 = vpop.f32.mrb[0].mxu0
    %v721 = vadd.f32 0.0, %v720
    %v722 = vpop.f32.mrb[0].mxu0
    %723 = vmatprep.mubr.f32.mxu0 0.0
    %724 = vmatmul.mubr.f32.gmra.mrb[0].mxu0 %v79
    %v725 = vpop.f32.mrb[0].mxu0
    %v726 = vadd.f32 0.0, %v725
    %v727 = vpop.f32.mrb[0].mxu0
    %728 = vmatprep.mubr.f32.mxu0 0.0
    %729 = vmatmul.mubr.f32.gmra.mrb[0].mxu0 %v82
    %v730 = vpop.f32.mrb[0].mxu0
    %v731 = vadd.f32 0.0, %v730
    %v732 = vpop.f32.mrb[0].mxu0
    %733 = vmatprep.mubr.f32.mxu0 0.0
    %734 = vmatmul.mubr.f32.gmra.mrb[0].mxu0 %v85
    %v735 = vpop.f32.mrb[0].mxu0
    %v736 = vadd.f32 0.0, %v735
    %v737 = vpop.f32.mrb[0].mxu0
    %738 = vmatprep.mubr.f32.mxu0 0.0
    %739 = vmatmul.mubr.f32.gmra.mrb[0].mxu0 %v88
    %v740 = vpop.f32.mrb[0].mxu0
    %v741 = vadd.f32 0.0, %v740
    %v742 = vpop.f32.mrb[0].mxu0
    %743 = vmatprep.mubr.f32.mxu0 0.0
    %744 = vmatmul.mubr.f32.gmra.mrb[0].mxu0 %v91
    %v745 = vpop.f32.mrb[0].mxu0
    %v746 = vadd.f32 0.0, %v745
    %v747 = vpop.f32.mrb[0].mxu0
    %748 = vmatprep.mubr.f32.mxu0 0.0
    %749 = vmatmul.mubr.f32.gmra.mrb[0].mxu0 %v94
    %v750 = vpop.f32.mrb[0].mxu0
    %v751 = vadd.f32 0.0, %v750
    %v752 = vpop.f32.mrb[0].mxu0
    %753 = vmatprep.mubr.f32.mxu0 0.0
    %754 = vmatmul.mubr.f32.gmra.mrb[0].mxu0 %v97
    %v755 = vpop.f32.mrb[0].mxu0
    %v756 = vadd.f32 0.0, %v755
    %v757 = vpop.f32.mrb[0].mxu0
    %758 = vdwg.mxu0
    %v759 = vmax.f32 %v582, %v681
    %v760 = vmax.f32 %v583, %v686
    %v761 = vmax.f32 %v584, %v691
    %v762 = vmax.f32 %v585, %v696
    %v763 = vmax.f32 %v586, %v701
    %v764 = vmax.f32 %v587, %v706
    %v765 = vmax.f32 %v588, %v711
    %v766 = vmax.f32 %v589, %v716
    %v767 = vmax.f32 %v590, %v721
    %v768 = vmax.f32 %v591, %v726
    %v769 = vmax.f32 %v592, %v731
    %v770 = vmax.f32 %v593, %v736
    %v771 = vmax.f32 %v594, %v741
    %v772 = vmax.f32 %v595, %v746
    %v773 = vmax.f32 %v596, %v751
    %v774 = vmax.f32 %v597, %v756
    %v775 = vlaneseq
    %v776 = vshrl.u32 %v775, 7
    %v777 = vsub.s32 4, %v776
    %v778 = vrot.slane %v28, %v777
    %vm779 = vcmp.eq.s32.totalorder %v778, %v30
    %vm780 = vcmp.eq.s32.totalorder %v778, %v31
    %vm781 = vcmp.eq.s32.totalorder %v778, %v32
    %vm782 = vcmp.eq.s32.totalorder %v778, %v33
    %v783 = vsel %vm779, 1, 0
    %v784 = vsel %vm780, 1, 0
    %v785 = vsel %vm781, 1, 0
    %v786 = vsel %vm782, 1, 0
    %v787 = vcvt.s32.f32 %v783
    %v788 = vcvt.s32.f32 %v784
    %v789 = vcvt.s32.f32 %v785
    %v790 = vcvt.s32.f32 %v786
    %791 = vmatprep.subr.mxu0 0.0
    %792 = vmatpush1.msra.mxu0 %v787
    %793 = vmatprep.subr.mxu0 0.0
    %794 = vmatpush1.msra.mxu0 %v788
    %795 = vmatprep.subr.mxu0 0.0
    %796 = vmatpush1.msra.mxu0 %v789
    %797 = vmatprep.subr.mxu0 0.0
    %798 = vmatpush1.msra.mxu0 %v790
    %799 = vmatprep.subr.mxu0 0.0
    %800 = vmatpush1.msra.mxu0 0.0
    %801 = vmatprep.subr.mxu0 0.0
    %802 = vmatpush1.msra.mxu0 0.0
    %803 = vmatprep.subr.mxu0 0.0
    %804 = vmatpush1.msra.mxu0 0.0
    %805 = vmatprep.subr.mxu0 0.0
    %806 = vmatpush1.msra.mxu0 0.0
    %807 = vmatprep.subr.mxu0 0.0
    %808 = vmatpush1.msra.mxu0 0.0
    %809 = vmatprep.subr.mxu0 0.0
    %810 = vmatpush1.msra.mxu0 0.0
    %811 = vmatprep.subr.mxu0 0.0
    %812 = vmatpush1.msra.mxu0 0.0
    %813 = vmatprep.subr.mxu0 0.0
    %814 = vmatpush1.msra.mxu0 0.0
    %815 = vmatprep.subr.mxu0 0.0
    %816 = vmatpush1.msra.mxu0 0.0
    %817 = vmatprep.subr.mxu0 0.0
    %818 = vmatpush1.msra.mxu0 0.0
    %819 = vmatprep.subr.mxu0 0.0
    %820 = vmatpush1.msra.mxu0 0.0
    %821 = vmatprep.subr.mxu0 0.0
    %822 = vmatpush1.msra.mxu0 0.0
    %823 = vmatprep.subr.mxu0 0.0
    %824 = vmatpush1.msra.mxu0 0.0
    %825 = vmatprep.subr.mxu0 0.0
    %826 = vmatpush1.msra.mxu0 0.0
    %827 = vmatprep.subr.mxu0 0.0
    %828 = vmatpush1.msra.mxu0 0.0
    %829 = vmatprep.subr.mxu0 0.0
    %830 = vmatpush1.msra.mxu0 0.0
    %831 = vmatprep.subr.mxu0 0.0
    %832 = vmatpush1.msra.mxu0 0.0
    %833 = vmatprep.subr.mxu0 0.0
    %834 = vmatpush1.msra.mxu0 0.0
    %835 = vmatprep.subr.mxu0 0.0
    %836 = vmatpush1.msra.mxu0 0.0
    %837 = vmatprep.subr.mxu0 0.0
    %838 = vmatpush1.msra.mxu0 0.0
    %839 = vmatprep.subr.mxu0 0.0
    %840 = vmatpush1.msra.mxu0 0.0
    %841 = vmatprep.subr.mxu0 0.0
    %842 = vmatpush1.msra.mxu0 0.0
    %843 = vmatprep.subr.mxu0 0.0
    %844 = vmatpush1.msra.mxu0 0.0
    %845 = vmatprep.subr.mxu0 0.0
    %846 = vmatpush1.msra.mxu0 0.0
    %847 = vmatprep.subr.mxu0 0.0
    %848 = vmatpush1.msra.mxu0 0.0
    %849 = vmatprep.subr.mxu0 0.0
    %850 = vmatpush1.msra.mxu0 0.0
    %851 = vmatprep.subr.mxu0 0.0
    %852 = vmatpush1.msra.mxu0 0.0
    %853 = vmatprep.subr.mxu0 0.0
    %854 = vmatpush1.msra.mxu0 0.0
    %855 = vmatprep.mubr.f32.mxu0 0.0
    %856 = vmatmul.mubr.f32.gmra.mrb[0].mxu0 %v52
    %v857 = vpop.f32.mrb[0].mxu0
    %v858 = vadd.f32 0.0, %v857
    %v859 = vpop.f32.mrb[0].mxu0
    %860 = vmatprep.mubr.f32.mxu0 0.0
    %861 = vmatmul.mubr.f32.gmra.mrb[0].mxu0 %v55
    %v862 = vpop.f32.mrb[0].mxu0
    %v863 = vadd.f32 0.0, %v862
    %v864 = vpop.f32.mrb[0].mxu0
    %865 = vmatprep.mubr.f32.mxu0 0.0
    %866 = vmatmul.mubr.f32.gmra.mrb[0].mxu0 %v58
    %v867 = vpop.f32.mrb[0].mxu0
    %v868 = vadd.f32 0.0, %v867
    %v869 = vpop.f32.mrb[0].mxu0
    %870 = vmatprep.mubr.f32.mxu0 0.0
    %871 = vmatmul.mubr.f32.gmra.mrb[0].mxu0 %v61
    %v872 = vpop.f32.mrb[0].mxu0
    %v873 = vadd.f32 0.0, %v872
    %v874 = vpop.f32.mrb[0].mxu0
    %875 = vmatprep.mubr.f32.mxu0 0.0
    %876 = vmatmul.mubr.f32.gmra.mrb[0].mxu0 %v64
    %v877 = vpop.f32.mrb[0].mxu0
    %v878 = vadd.f32 0.0, %v877
    %v879 = vpop.f32.mrb[0].mxu0
    %880 = vmatprep.mubr.f32.mxu0 0.0
    %881 = vmatmul.mubr.f32.gmra.mrb[0].mxu0 %v67
    %v882 = vpop.f32.mrb[0].mxu0
    %v883 = vadd.f32 0.0, %v882
    %v884 = vpop.f32.mrb[0].mxu0
    %885 = vmatprep.mubr.f32.mxu0 0.0
    %886 = vmatmul.mubr.f32.gmra.mrb[0].mxu0 %v70
    %v887 = vpop.f32.mrb[0].mxu0
    %v888 = vadd.f32 0.0, %v887
    %v889 = vpop.f32.mrb[0].mxu0
    %890 = vmatprep.mubr.f32.mxu0 0.0
    %891 = vmatmul.mubr.f32.gmra.mrb[0].mxu0 %v73
    %v892 = vpop.f32.mrb[0].mxu0
    %v893 = vadd.f32 0.0, %v892
    %v894 = vpop.f32.mrb[0].mxu0
    %895 = vmatprep.mubr.f32.mxu0 0.0
    %896 = vmatmul.mubr.f32.gmra.mrb[0].mxu0 %v76
    %v897 = vpop.f32.mrb[0].mxu0
    %v898 = vadd.f32 0.0, %v897
    %v899 = vpop.f32.mrb[0].mxu0
    %900 = vmatprep.mubr.f32.mxu0 0.0
    %901 = vmatmul.mubr.f32.gmra.mrb[0].mxu0 %v79
    %v902 = vpop.f32.mrb[0].mxu0
    %v903 = vadd.f32 0.0, %v902
    %v904 = vpop.f32.mrb[0].mxu0
    %905 = vmatprep.mubr.f32.mxu0 0.0
    %906 = vmatmul.mubr.f32.gmra.mrb[0].mxu0 %v82
    %v907 = vpop.f32.mrb[0].mxu0
    %v908 = vadd.f32 0.0, %v907
    %v909 = vpop.f32.mrb[0].mxu0
    %910 = vmatprep.mubr.f32.mxu0 0.0
    %911 = vmatmul.mubr.f32.gmra.mrb[0].mxu0 %v85
    %v912 = vpop.f32.mrb[0].mxu0
    %v913 = vadd.f32 0.0, %v912
    %v914 = vpop.f32.mrb[0].mxu0
    %915 = vmatprep.mubr.f32.mxu0 0.0
    %916 = vmatmul.mubr.f32.gmra.mrb[0].mxu0 %v88
    %v917 = vpop.f32.mrb[0].mxu0
    %v918 = vadd.f32 0.0, %v917
    %v919 = vpop.f32.mrb[0].mxu0
    %920 = vmatprep.mubr.f32.mxu0 0.0
    %921 = vmatmul.mubr.f32.gmra.mrb[0].mxu0 %v91
    %v922 = vpop.f32.mrb[0].mxu0
    %v923 = vadd.f32 0.0, %v922
    %v924 = vpop.f32.mrb[0].mxu0
    %925 = vmatprep.mubr.f32.mxu0 0.0
    %926 = vmatmul.mubr.f32.gmra.mrb[0].mxu0 %v94
    %v927 = vpop.f32.mrb[0].mxu0
    %v928 = vadd.f32 0.0, %v927
    %v929 = vpop.f32.mrb[0].mxu0
    %930 = vmatprep.mubr.f32.mxu0 0.0
    %931 = vmatmul.mubr.f32.gmra.mrb[0].mxu0 %v97
    %v932 = vpop.f32.mrb[0].mxu0
    %v933 = vadd.f32 0.0, %v932
    %v934 = vpop.f32.mrb[0].mxu0
    %935 = vdwg.mxu0
    %v936 = vmax.f32 %v759, %v858
    %v937 = vmax.f32 %v760, %v863
    %v938 = vmax.f32 %v761, %v868
    %v939 = vmax.f32 %v762, %v873
    %v940 = vmax.f32 %v763, %v878
    %v941 = vmax.f32 %v764, %v883
    %v942 = vmax.f32 %v765, %v888
    %v943 = vmax.f32 %v766, %v893
    %v944 = vmax.f32 %v767, %v898
    %v945 = vmax.f32 %v768, %v903
    %v946 = vmax.f32 %v769, %v908
    %v947 = vmax.f32 %v770, %v913
    %v948 = vmax.f32 %v771, %v918
    %v949 = vmax.f32 %v772, %v923
    %v950 = vmax.f32 %v773, %v928
    %v951 = vmax.f32 %v774, %v933
    %v952 = vlaneseq
    %v953 = vshrl.u32 %v952, 7
    %v954 = vsub.s32 5, %v953
    %v955 = vrot.slane %v28, %v954
    %vm956 = vcmp.eq.s32.totalorder %v955, %v30
    %vm957 = vcmp.eq.s32.totalorder %v955, %v31
    %vm958 = vcmp.eq.s32.totalorder %v955, %v32
    %vm959 = vcmp.eq.s32.totalorder %v955, %v33
    %v960 = vsel %vm956, 1, 0
    %v961 = vsel %vm957, 1, 0
    %v962 = vsel %vm958, 1, 0
    %v963 = vsel %vm959, 1, 0
    %v964 = vcvt.s32.f32 %v960
    %v965 = vcvt.s32.f32 %v961
    %v966 = vcvt.s32.f32 %v962
    %v967 = vcvt.s32.f32 %v963
    %968 = vmatprep.subr.mxu0 0.0
    %969 = vmatpush1.msra.mxu0 %v964
    %970 = vmatprep.subr.mxu0 0.0
    %971 = vmatpush1.msra.mxu0 %v965
    %972 = vmatprep.subr.mxu0 0.0
    %973 = vmatpush1.msra.mxu0 %v966
    %974 = vmatprep.subr.mxu0 0.0
    %975 = vmatpush1.msra.mxu0 %v967
    %976 = vmatprep.subr.mxu0 0.0
    %977 = vmatpush1.msra.mxu0 0.0
    %978 = vmatprep.subr.mxu0 0.0
    %979 = vmatpush1.msra.mxu0 0.0
    %980 = vmatprep.subr.mxu0 0.0
    %981 = vmatpush1.msra.mxu0 0.0
    %982 = vmatprep.subr.mxu0 0.0
    %983 = vmatpush1.msra.mxu0 0.0
    %984 = vmatprep.subr.mxu0 0.0
    %985 = vmatpush1.msra.mxu0 0.0
    %986 = vmatprep.subr.mxu0 0.0
    %987 = vmatpush1.msra.mxu0 0.0
    %988 = vmatprep.subr.mxu0 0.0
    %989 = vmatpush1.msra.mxu0 0.0
    %990 = vmatprep.subr.mxu0 0.0
    %991 = vmatpush1.msra.mxu0 0.0
    %992 = vmatprep.subr.mxu0 0.0
    %993 = vmatpush1.msra.mxu0 0.0
    %994 = vmatprep.subr.mxu0 0.0
    %995 = vmatpush1.msra.mxu0 0.0
    %996 = vmatprep.subr.mxu0 0.0
    %997 = vmatpush1.msra.mxu0 0.0
    %998 = vmatprep.subr.mxu0 0.0
    %999 = vmatpush1.msra.mxu0 0.0
    %1000 = vmatprep.subr.mxu0 0.0
    %1001 = vmatpush1.msra.mxu0 0.0
    %1002 = vmatprep.subr.mxu0 0.0
    %1003 = vmatpush1.msra.mxu0 0.0
    %1004 = vmatprep.subr.mxu0 0.0
    %1005 = vmatpush1.msra.mxu0 0.0
    %1006 = vmatprep.subr.mxu0 0.0
    %1007 = vmatpush1.msra.mxu0 0.0
    %1008 = vmatprep.subr.mxu0 0.0
    %1009 = vmatpush1.msra.mxu0 0.0
    %1010 = vmatprep.subr.mxu0 0.0
    %1011 = vmatpush1.msra.mxu0 0.0
    %1012 = vmatprep.subr.mxu0 0.0
    %1013 = vmatpush1.msra.mxu0 0.0
    %1014 = vmatprep.subr.mxu0 0.0
    %1015 = vmatpush1.msra.mxu0 0.0
    %1016 = vmatprep.subr.mxu0 0.0
    %1017 = vmatpush1.msra.mxu0 0.0
    %1018 = vmatprep.subr.mxu0 0.0
    %1019 = vmatpush1.msra.mxu0 0.0
    %1020 = vmatprep.subr.mxu0 0.0
    %1021 = vmatpush1.msra.mxu0 0.0
    %1022 = vmatprep.subr.mxu0 0.0
    %1023 = vmatpush1.msra.mxu0 0.0
    %1024 = vmatprep.subr.mxu0 0.0
    %1025 = vmatpush1.msra.mxu0 0.0
    %1026 = vmatprep.subr.mxu0 0.0
    %1027 = vmatpush1.msra.mxu0 0.0
    %1028 = vmatprep.subr.mxu0 0.0
    %1029 = vmatpush1.msra.mxu0 0.0
    %1030 = vmatprep.subr.mxu0 0.0
    %1031 = vmatpush1.msra.mxu0 0.0
    %1032 = vmatprep.mubr.f32.mxu0 0.0
    %1033 = vmatmul.mubr.f32.gmra.mrb[0].mxu0 %v52
    %v1034 = vpop.f32.mrb[0].mxu0
    %v1035 = vadd.f32 0.0, %v1034
    %v1036 = vpop.f32.mrb[0].mxu0
    %1037 = vmatprep.mubr.f32.mxu0 0.0
    %1038 = vmatmul.mubr.f32.gmra.mrb[0].mxu0 %v55
    %v1039 = vpop.f32.mrb[0].mxu0
    %v1040 = vadd.f32 0.0, %v1039
    %v1041 = vpop.f32.mrb[0].mxu0
    %1042 = vmatprep.mubr.f32.mxu0 0.0
    %1043 = vmatmul.mubr.f32.gmra.mrb[0].mxu0 %v58
    %v1044 = vpop.f32.mrb[0].mxu0
    %v1045 = vadd.f32 0.0, %v1044
    %v1046 = vpop.f32.mrb[0].mxu0
    %1047 = vmatprep.mubr.f32.mxu0 0.0
    %1048 = vmatmul.mubr.f32.gmra.mrb[0].mxu0 %v61
    %v1049 = vpop.f32.mrb[0].mxu0
    %v1050 = vadd.f32 0.0, %v1049
    %v1051 = vpop.f32.mrb[0].mxu0
    %1052 = vmatprep.mubr.f32.mxu0 0.0
    %1053 = vmatmul.mubr.f32.gmra.mrb[0].mxu0 %v64
    %v1054 = vpop.f32.mrb[0].mxu0
    %v1055 = vadd.f32 0.0, %v1054
    %v1056 = vpop.f32.mrb[0].mxu0
    %1057 = vmatprep.mubr.f32.mxu0 0.0
    %1058 = vmatmul.mubr.f32.gmra.mrb[0].mxu0 %v67
    %v1059 = vpop.f32.mrb[0].mxu0
    %v1060 = vadd.f32 0.0, %v1059
    %v1061 = vpop.f32.mrb[0].mxu0
    %1062 = vmatprep.mubr.f32.mxu0 0.0
    %1063 = vmatmul.mubr.f32.gmra.mrb[0].mxu0 %v70
    %v1064 = vpop.f32.mrb[0].mxu0
    %v1065 = vadd.f32 0.0, %v1064
    %v1066 = vpop.f32.mrb[0].mxu0
    %1067 = vmatprep.mubr.f32.mxu0 0.0
    %1068 = vmatmul.mubr.f32.gmra.mrb[0].mxu0 %v73
    %v1069 = vpop.f32.mrb[0].mxu0
    %v1070 = vadd.f32 0.0, %v1069
    %v1071 = vpop.f32.mrb[0].mxu0
    %1072 = vmatprep.mubr.f32.mxu0 0.0
    %1073 = vmatmul.mubr.f32.gmra.mrb[0].mxu0 %v76
    %v1074 = vpop.f32.mrb[0].mxu0
    %v1075 = vadd.f32 0.0, %v1074
    %v1076 = vpop.f32.mrb[0].mxu0
    %1077 = vmatprep.mubr.f32.mxu0 0.0
    %1078 = vmatmul.mubr.f32.gmra.mrb[0].mxu0 %v79
    %v1079 = vpop.f32.mrb[0].mxu0
    %v1080 = vadd.f32 0.0, %v1079
    %v1081 = vpop.f32.mrb[0].mxu0
    %1082 = vmatprep.mubr.f32.mxu0 0.0
    %1083 = vmatmul.mubr.f32.gmra.mrb[0].mxu0 %v82
    %v1084 = vpop.f32.mrb[0].mxu0
    %v1085 = vadd.f32 0.0, %v1084
    %v1086 = vpop.f32.mrb[0].mxu0
    %1087 = vmatprep.mubr.f32.mxu0 0.0
    %1088 = vmatmul.mubr.f32.gmra.mrb[0].mxu0 %v85
    %v1089 = vpop.f32.mrb[0].mxu0
    %v1090 = vadd.f32 0.0, %v1089
    %v1091 = vpop.f32.mrb[0].mxu0
    %1092 = vmatprep.mubr.f32.mxu0 0.0
    %1093 = vmatmul.mubr.f32.gmra.mrb[0].mxu0 %v88
    %v1094 = vpop.f32.mrb[0].mxu0
    %v1095 = vadd.f32 0.0, %v1094
    %v1096 = vpop.f32.mrb[0].mxu0
    %1097 = vmatprep.mubr.f32.mxu0 0.0
    %1098 = vmatmul.mubr.f32.gmra.mrb[0].mxu0 %v91
    %v1099 = vpop.f32.mrb[0].mxu0
    %v1100 = vadd.f32 0.0, %v1099
    %v1101 = vpop.f32.mrb[0].mxu0
    %1102 = vmatprep.mubr.f32.mxu0 0.0
    %1103 = vmatmul.mubr.f32.gmra.mrb[0].mxu0 %v94
    %v1104 = vpop.f32.mrb[0].mxu0
    %v1105 = vadd.f32 0.0, %v1104
    %v1106 = vpop.f32.mrb[0].mxu0
    %1107 = vmatprep.mubr.f32.mxu0 0.0
    %1108 = vmatmul.mubr.f32.gmra.mrb[0].mxu0 %v97
    %v1109 = vpop.f32.mrb[0].mxu0
    %v1110 = vadd.f32 0.0, %v1109
    %v1111 = vpop.f32.mrb[0].mxu0
    %1112 = vdwg.mxu0
    %v1113 = vmax.f32 %v936, %v1035
    %v1114 = vmax.f32 %v937, %v1040
    %v1115 = vmax.f32 %v938, %v1045
    %v1116 = vmax.f32 %v939, %v1050
    %v1117 = vmax.f32 %v940, %v1055
    %v1118 = vmax.f32 %v941, %v1060
    %v1119 = vmax.f32 %v942, %v1065
    %v1120 = vmax.f32 %v943, %v1070
    %v1121 = vmax.f32 %v944, %v1075
    %v1122 = vmax.f32 %v945, %v1080
    %v1123 = vmax.f32 %v946, %v1085
    %v1124 = vmax.f32 %v947, %v1090
    %v1125 = vmax.f32 %v948, %v1095
    %v1126 = vmax.f32 %v949, %v1100
    %v1127 = vmax.f32 %v950, %v1105
    %v1128 = vmax.f32 %v951, %v1110
    %v1129 = vlaneseq
    %v1130 = vshrl.u32 %v1129, 7
    %v1131 = vsub.s32 6, %v1130
    %v1132 = vrot.slane %v28, %v1131
    %vm1133 = vcmp.eq.s32.totalorder %v1132, %v30
    %vm1134 = vcmp.eq.s32.totalorder %v1132, %v31
    %vm1135 = vcmp.eq.s32.totalorder %v1132, %v32
    %vm1136 = vcmp.eq.s32.totalorder %v1132, %v33
    %v1137 = vsel %vm1133, 1, 0
    %v1138 = vsel %vm1134, 1, 0
    %v1139 = vsel %vm1135, 1, 0
    %v1140 = vsel %vm1136, 1, 0
    %v1141 = vcvt.s32.f32 %v1137
    %v1142 = vcvt.s32.f32 %v1138
    %v1143 = vcvt.s32.f32 %v1139
    %v1144 = vcvt.s32.f32 %v1140
    %1145 = vmatprep.subr.mxu0 0.0
    %1146 = vmatpush1.msra.mxu0 %v1141
    %1147 = vmatprep.subr.mxu0 0.0
    %1148 = vmatpush1.msra.mxu0 %v1142
    %1149 = vmatprep.subr.mxu0 0.0
    %1150 = vmatpush1.msra.mxu0 %v1143
    %1151 = vmatprep.subr.mxu0 0.0
    %1152 = vmatpush1.msra.mxu0 %v1144
    %1153 = vmatprep.subr.mxu0 0.0
    %1154 = vmatpush1.msra.mxu0 0.0
    %1155 = vmatprep.subr.mxu0 0.0
    %1156 = vmatpush1.msra.mxu0 0.0
    %1157 = vmatprep.subr.mxu0 0.0
    %1158 = vmatpush1.msra.mxu0 0.0
    %1159 = vmatprep.subr.mxu0 0.0
    %1160 = vmatpush1.msra.mxu0 0.0
    %1161 = vmatprep.subr.mxu0 0.0
    %1162 = vmatpush1.msra.mxu0 0.0
    %1163 = vmatprep.subr.mxu0 0.0
    %1164 = vmatpush1.msra.mxu0 0.0
    %1165 = vmatprep.subr.mxu0 0.0
    %1166 = vmatpush1.msra.mxu0 0.0
    %1167 = vmatprep.subr.mxu0 0.0
    %1168 = vmatpush1.msra.mxu0 0.0
    %1169 = vmatprep.subr.mxu0 0.0
    %1170 = vmatpush1.msra.mxu0 0.0
    %1171 = vmatprep.subr.mxu0 0.0
    %1172 = vmatpush1.msra.mxu0 0.0
    %1173 = vmatprep.subr.mxu0 0.0
    %1174 = vmatpush1.msra.mxu0 0.0
    %1175 = vmatprep.subr.mxu0 0.0
    %1176 = vmatpush1.msra.mxu0 0.0
    %1177 = vmatprep.subr.mxu0 0.0
    %1178 = vmatpush1.msra.mxu0 0.0
    %1179 = vmatprep.subr.mxu0 0.0
    %1180 = vmatpush1.msra.mxu0 0.0
    %1181 = vmatprep.subr.mxu0 0.0
    %1182 = vmatpush1.msra.mxu0 0.0
    %1183 = vmatprep.subr.mxu0 0.0
    %1184 = vmatpush1.msra.mxu0 0.0
    %1185 = vmatprep.subr.mxu0 0.0
    %1186 = vmatpush1.msra.mxu0 0.0
    %1187 = vmatprep.subr.mxu0 0.0
    %1188 = vmatpush1.msra.mxu0 0.0
    %1189 = vmatprep.subr.mxu0 0.0
    %1190 = vmatpush1.msra.mxu0 0.0
    %1191 = vmatprep.subr.mxu0 0.0
    %1192 = vmatpush1.msra.mxu0 0.0
    %1193 = vmatprep.subr.mxu0 0.0
    %1194 = vmatpush1.msra.mxu0 0.0
    %1195 = vmatprep.subr.mxu0 0.0
    %1196 = vmatpush1.msra.mxu0 0.0
    %1197 = vmatprep.subr.mxu0 0.0
    %1198 = vmatpush1.msra.mxu0 0.0
    %1199 = vmatprep.subr.mxu0 0.0
    %1200 = vmatpush1.msra.mxu0 0.0
    %1201 = vmatprep.subr.mxu0 0.0
    %1202 = vmatpush1.msra.mxu0 0.0
    %1203 = vmatprep.subr.mxu0 0.0
    %1204 = vmatpush1.msra.mxu0 0.0
    %1205 = vmatprep.subr.mxu0 0.0
    %1206 = vmatpush1.msra.mxu0 0.0
    %1207 = vmatprep.subr.mxu0 0.0
    %1208 = vmatpush1.msra.mxu0 0.0
    %1209 = vmatprep.mubr.f32.mxu0 0.0
    %1210 = vmatmul.mubr.f32.gmra.mrb[0].mxu0 %v52
    %v1211 = vpop.f32.mrb[0].mxu0
    %v1212 = vadd.f32 0.0, %v1211
    %v1213 = vpop.f32.mrb[0].mxu0
    %1214 = vmatprep.mubr.f32.mxu0 0.0
    %1215 = vmatmul.mubr.f32.gmra.mrb[0].mxu0 %v55
    %v1216 = vpop.f32.mrb[0].mxu0
    %v1217 = vadd.f32 0.0, %v1216
    %v1218 = vpop.f32.mrb[0].mxu0
    %1219 = vmatprep.mubr.f32.mxu0 0.0
    %1220 = vmatmul.mubr.f32.gmra.mrb[0].mxu0 %v58
    %v1221 = vpop.f32.mrb[0].mxu0
    %v1222 = vadd.f32 0.0, %v1221
    %v1223 = vpop.f32.mrb[0].mxu0
    %1224 = vmatprep.mubr.f32.mxu0 0.0
    %1225 = vmatmul.mubr.f32.gmra.mrb[0].mxu0 %v61
    %v1226 = vpop.f32.mrb[0].mxu0
    %v1227 = vadd.f32 0.0, %v1226
    %v1228 = vpop.f32.mrb[0].mxu0
    %1229 = vmatprep.mubr.f32.mxu0 0.0
    %1230 = vmatmul.mubr.f32.gmra.mrb[0].mxu0 %v64
    %v1231 = vpop.f32.mrb[0].mxu0
    %v1232 = vadd.f32 0.0, %v1231
    %v1233 = vpop.f32.mrb[0].mxu0
    %1234 = vmatprep.mubr.f32.mxu0 0.0
    %1235 = vmatmul.mubr.f32.gmra.mrb[0].mxu0 %v67
    %v1236 = vpop.f32.mrb[0].mxu0
    %v1237 = vadd.f32 0.0, %v1236
    %v1238 = vpop.f32.mrb[0].mxu0
    %1239 = vmatprep.mubr.f32.mxu0 0.0
    %1240 = vmatmul.mubr.f32.gmra.mrb[0].mxu0 %v70
    %v1241 = vpop.f32.mrb[0].mxu0
    %v1242 = vadd.f32 0.0, %v1241
    %v1243 = vpop.f32.mrb[0].mxu0
    %1244 = vmatprep.mubr.f32.mxu0 0.0
    %1245 = vmatmul.mubr.f32.gmra.mrb[0].mxu0 %v73
    %v1246 = vpop.f32.mrb[0].mxu0
    %v1247 = vadd.f32 0.0, %v1246
    %v1248 = vpop.f32.mrb[0].mxu0
    %1249 = vmatprep.mubr.f32.mxu0 0.0
    %1250 = vmatmul.mubr.f32.gmra.mrb[0].mxu0 %v76
    %v1251 = vpop.f32.mrb[0].mxu0
    %v1252 = vadd.f32 0.0, %v1251
    %v1253 = vpop.f32.mrb[0].mxu0
    %1254 = vmatprep.mubr.f32.mxu0 0.0
    %1255 = vmatmul.mubr.f32.gmra.mrb[0].mxu0 %v79
    %v1256 = vpop.f32.mrb[0].mxu0
    %v1257 = vadd.f32 0.0, %v1256
    %v1258 = vpop.f32.mrb[0].mxu0
    %1259 = vmatprep.mubr.f32.mxu0 0.0
    %1260 = vmatmul.mubr.f32.gmra.mrb[0].mxu0 %v82
    %v1261 = vpop.f32.mrb[0].mxu0
    %v1262 = vadd.f32 0.0, %v1261
    %v1263 = vpop.f32.mrb[0].mxu0
    %1264 = vmatprep.mubr.f32.mxu0 0.0
    %1265 = vmatmul.mubr.f32.gmra.mrb[0].mxu0 %v85
    %v1266 = vpop.f32.mrb[0].mxu0
    %v1267 = vadd.f32 0.0, %v1266
    %v1268 = vpop.f32.mrb[0].mxu0
    %1269 = vmatprep.mubr.f32.mxu0 0.0
    %1270 = vmatmul.mubr.f32.gmra.mrb[0].mxu0 %v88
    %v1271 = vpop.f32.mrb[0].mxu0
    %v1272 = vadd.f32 0.0, %v1271
    %v1273 = vpop.f32.mrb[0].mxu0
    %1274 = vmatprep.mubr.f32.mxu0 0.0
    %1275 = vmatmul.mubr.f32.gmra.mrb[0].mxu0 %v91
    %v1276 = vpop.f32.mrb[0].mxu0
    %v1277 = vadd.f32 0.0, %v1276
    %v1278 = vpop.f32.mrb[0].mxu0
    %1279 = vmatprep.mubr.f32.mxu0 0.0
    %1280 = vmatmul.mubr.f32.gmra.mrb[0].mxu0 %v94
    %v1281 = vpop.f32.mrb[0].mxu0
    %v1282 = vadd.f32 0.0, %v1281
    %v1283 = vpop.f32.mrb[0].mxu0
    %1284 = vmatprep.mubr.f32.mxu0 0.0
    %1285 = vmatmul.mubr.f32.gmra.mrb[0].mxu0 %v97
    %v1286 = vpop.f32.mrb[0].mxu0
    %v1287 = vadd.f32 0.0, %v1286
    %v1288 = vpop.f32.mrb[0].mxu0
    %1289 = vdwg.mxu0
    %v1290 = vmax.f32 %v1113, %v1212
    %v1291 = vmax.f32 %v1114, %v1217
    %v1292 = vmax.f32 %v1115, %v1222
    %v1293 = vmax.f32 %v1116, %v1227
    %v1294 = vmax.f32 %v1117, %v1232
    %v1295 = vmax.f32 %v1118, %v1237
    %v1296 = vmax.f32 %v1119, %v1242
    %v1297 = vmax.f32 %v1120, %v1247
    %v1298 = vmax.f32 %v1121, %v1252
    %v1299 = vmax.f32 %v1122, %v1257
    %v1300 = vmax.f32 %v1123, %v1262
    %v1301 = vmax.f32 %v1124, %v1267
    %v1302 = vmax.f32 %v1125, %v1272
    %v1303 = vmax.f32 %v1126, %v1277
    %v1304 = vmax.f32 %v1127, %v1282
    %v1305 = vmax.f32 %v1128, %v1287
    %v1306 = vlaneseq
    %v1307 = vshrl.u32 %v1306, 7
    %v1308 = vsub.s32 7, %v1307
    %v1309 = vrot.slane %v28, %v1308
    %vm1310 = vcmp.eq.s32.totalorder %v1309, %v30
    %vm1311 = vcmp.eq.s32.totalorder %v1309, %v31
    %vm1312 = vcmp.eq.s32.totalorder %v1309, %v32
    %vm1313 = vcmp.eq.s32.totalorder %v1309, %v33
    %v1314 = vsel %vm1310, 1, 0
    %v1315 = vsel %vm1311, 1, 0
    %v1316 = vsel %vm1312, 1, 0
    %v1317 = vsel %vm1313, 1, 0
    %v1318 = vcvt.s32.f32 %v1314
    %v1319 = vcvt.s32.f32 %v1315
    %v1320 = vcvt.s32.f32 %v1316
    %v1321 = vcvt.s32.f32 %v1317
    %1322 = vmatprep.subr.mxu0 0.0
    %1323 = vmatpush1.msra.mxu0 %v1318
    %1324 = vmatprep.subr.mxu0 0.0
    %1325 = vmatpush1.msra.mxu0 %v1319
    %1326 = vmatprep.subr.mxu0 0.0
    %1327 = vmatpush1.msra.mxu0 %v1320
    %1328 = vmatprep.subr.mxu0 0.0
    %1329 = vmatpush1.msra.mxu0 %v1321
    %1330 = vmatprep.subr.mxu0 0.0
    %1331 = vmatpush1.msra.mxu0 0.0
    %1332 = vmatprep.subr.mxu0 0.0
    %1333 = vmatpush1.msra.mxu0 0.0
    %1334 = vmatprep.subr.mxu0 0.0
    %1335 = vmatpush1.msra.mxu0 0.0
    %1336 = vmatprep.subr.mxu0 0.0
    %1337 = vmatpush1.msra.mxu0 0.0
    %1338 = vmatprep.subr.mxu0 0.0
    %1339 = vmatpush1.msra.mxu0 0.0
    %1340 = vmatprep.subr.mxu0 0.0
    %1341 = vmatpush1.msra.mxu0 0.0
    %1342 = vmatprep.subr.mxu0 0.0
    %1343 = vmatpush1.msra.mxu0 0.0
    %1344 = vmatprep.subr.mxu0 0.0
    %1345 = vmatpush1.msra.mxu0 0.0
    %1346 = vmatprep.subr.mxu0 0.0
    %1347 = vmatpush1.msra.mxu0 0.0
    %1348 = vmatprep.subr.mxu0 0.0
    %1349 = vmatpush1.msra.mxu0 0.0
    %1350 = vmatprep.subr.mxu0 0.0
    %1351 = vmatpush1.msra.mxu0 0.0
    %1352 = vmatprep.subr.mxu0 0.0
    %1353 = vmatpush1.msra.mxu0 0.0
    %1354 = vmatprep.subr.mxu0 0.0
    %1355 = vmatpush1.msra.mxu0 0.0
    %1356 = vmatprep.subr.mxu0 0.0
    %1357 = vmatpush1.msra.mxu0 0.0
    %1358 = vmatprep.subr.mxu0 0.0
    %1359 = vmatpush1.msra.mxu0 0.0
    %1360 = vmatprep.subr.mxu0 0.0
    %1361 = vmatpush1.msra.mxu0 0.0
    %1362 = vmatprep.subr.mxu0 0.0
    %1363 = vmatpush1.msra.mxu0 0.0
    %1364 = vmatprep.subr.mxu0 0.0
    %1365 = vmatpush1.msra.mxu0 0.0
    %1366 = vmatprep.subr.mxu0 0.0
    %1367 = vmatpush1.msra.mxu0 0.0
    %1368 = vmatprep.subr.mxu0 0.0
    %1369 = vmatpush1.msra.mxu0 0.0
    %1370 = vmatprep.subr.mxu0 0.0
    %1371 = vmatpush1.msra.mxu0 0.0
    %1372 = vmatprep.subr.mxu0 0.0
    %1373 = vmatpush1.msra.mxu0 0.0
    %1374 = vmatprep.subr.mxu0 0.0
    %1375 = vmatpush1.msra.mxu0 0.0
    %1376 = vmatprep.subr.mxu0 0.0
    %1377 = vmatpush1.msra.mxu0 0.0
    %1378 = vmatprep.subr.mxu0 0.0
    %1379 = vmatpush1.msra.mxu0 0.0
    %1380 = vmatprep.subr.mxu0 0.0
    %1381 = vmatpush1.msra.mxu0 0.0
    %1382 = vmatprep.subr.mxu0 0.0
    %1383 = vmatpush1.msra.mxu0 0.0
    %1384 = vmatprep.subr.mxu0 0.0
    %1385 = vmatpush1.msra.mxu0 0.0
    %1386 = vmatprep.mubr.f32.mxu0 0.0
    %1387 = vmatmul.mubr.f32.gmra.mrb[0].mxu0 %v52
    %v1388 = vpop.f32.mrb[0].mxu0
    %v1389 = vadd.f32 0.0, %v1388
    %v1390 = vpop.f32.mrb[0].mxu0
    %1391 = vmatprep.mubr.f32.mxu0 0.0
    %1392 = vmatmul.mubr.f32.gmra.mrb[0].mxu0 %v55
    %v1393 = vpop.f32.mrb[0].mxu0
    %v1394 = vadd.f32 0.0, %v1393
    %v1395 = vpop.f32.mrb[0].mxu0
    %1396 = vmatprep.mubr.f32.mxu0 0.0
    %1397 = vmatmul.mubr.f32.gmra.mrb[0].mxu0 %v58
    %v1398 = vpop.f32.mrb[0].mxu0
    %v1399 = vadd.f32 0.0, %v1398
    %v1400 = vpop.f32.mrb[0].mxu0
    %1401 = vmatprep.mubr.f32.mxu0 0.0
    %1402 = vmatmul.mubr.f32.gmra.mrb[0].mxu0 %v61
    %v1403 = vpop.f32.mrb[0].mxu0
    %v1404 = vadd.f32 0.0, %v1403
    %v1405 = vpop.f32.mrb[0].mxu0
    %1406 = vmatprep.mubr.f32.mxu0 0.0
    %1407 = vmatmul.mubr.f32.gmra.mrb[0].mxu0 %v64
    %v1408 = vpop.f32.mrb[0].mxu0
    %v1409 = vadd.f32 0.0, %v1408
    %v1410 = vpop.f32.mrb[0].mxu0
    %1411 = vmatprep.mubr.f32.mxu0 0.0
    %1412 = vmatmul.mubr.f32.gmra.mrb[0].mxu0 %v67
    %v1413 = vpop.f32.mrb[0].mxu0
    %v1414 = vadd.f32 0.0, %v1413
    %v1415 = vpop.f32.mrb[0].mxu0
    %1416 = vmatprep.mubr.f32.mxu0 0.0
    %1417 = vmatmul.mubr.f32.gmra.mrb[0].mxu0 %v70
    %v1418 = vpop.f32.mrb[0].mxu0
    %v1419 = vadd.f32 0.0, %v1418
    %v1420 = vpop.f32.mrb[0].mxu0
    %1421 = vmatprep.mubr.f32.mxu0 0.0
    %1422 = vmatmul.mubr.f32.gmra.mrb[0].mxu0 %v73
    %v1423 = vpop.f32.mrb[0].mxu0
    %v1424 = vadd.f32 0.0, %v1423
    %v1425 = vpop.f32.mrb[0].mxu0
    %1426 = vmatprep.mubr.f32.mxu0 0.0
    %1427 = vmatmul.mubr.f32.gmra.mrb[0].mxu0 %v76
    %v1428 = vpop.f32.mrb[0].mxu0
    %v1429 = vadd.f32 0.0, %v1428
    %v1430 = vpop.f32.mrb[0].mxu0
    %1431 = vmatprep.mubr.f32.mxu0 0.0
    %1432 = vmatmul.mubr.f32.gmra.mrb[0].mxu0 %v79
    %v1433 = vpop.f32.mrb[0].mxu0
    %v1434 = vadd.f32 0.0, %v1433
    %v1435 = vpop.f32.mrb[0].mxu0
    %1436 = vmatprep.mubr.f32.mxu0 0.0
    %1437 = vmatmul.mubr.f32.gmra.mrb[0].mxu0 %v82
    %v1438 = vpop.f32.mrb[0].mxu0
    %v1439 = vadd.f32 0.0, %v1438
    %v1440 = vpop.f32.mrb[0].mxu0
    %1441 = vmatprep.mubr.f32.mxu0 0.0
    %1442 = vmatmul.mubr.f32.gmra.mrb[0].mxu0 %v85
    %v1443 = vpop.f32.mrb[0].mxu0
    %v1444 = vadd.f32 0.0, %v1443
    %v1445 = vpop.f32.mrb[0].mxu0
    %1446 = vmatprep.mubr.f32.mxu0 0.0
    %1447 = vmatmul.mubr.f32.gmra.mrb[0].mxu0 %v88
    %v1448 = vpop.f32.mrb[0].mxu0
    %v1449 = vadd.f32 0.0, %v1448
    %v1450 = vpop.f32.mrb[0].mxu0
    %1451 = vmatprep.mubr.f32.mxu0 0.0
    %1452 = vmatmul.mubr.f32.gmra.mrb[0].mxu0 %v91
    %v1453 = vpop.f32.mrb[0].mxu0
    %v1454 = vadd.f32 0.0, %v1453
    %v1455 = vpop.f32.mrb[0].mxu0
    %1456 = vmatprep.mubr.f32.mxu0 0.0
    %1457 = vmatmul.mubr.f32.gmra.mrb[0].mxu0 %v94
    %v1458 = vpop.f32.mrb[0].mxu0
    %v1459 = vadd.f32 0.0, %v1458
    %v1460 = vpop.f32.mrb[0].mxu0
    %1461 = vmatprep.mubr.f32.mxu0 0.0
    %1462 = vmatmul.mubr.f32.gmra.mrb[0].mxu0 %v97
    %v1463 = vpop.f32.mrb[0].mxu0
    %v1464 = vadd.f32 0.0, %v1463
    %v1465 = vpop.f32.mrb[0].mxu0
    %1466 = vdwg.mxu0
    %v1467 = vmax.f32 %v1290, %v1389
    %v1468 = vmax.f32 %v1291, %v1394
    %v1469 = vmax.f32 %v1292, %v1399
    %v1470 = vmax.f32 %v1293, %v1404
    %v1471 = vmax.f32 %v1294, %v1409
    %v1472 = vmax.f32 %v1295, %v1414
    %v1473 = vmax.f32 %v1296, %v1419
    %v1474 = vmax.f32 %v1297, %v1424
    %v1475 = vmax.f32 %v1298, %v1429
    %v1476 = vmax.f32 %v1299, %v1434
    %v1477 = vmax.f32 %v1300, %v1439
    %v1478 = vmax.f32 %v1301, %v1444
    %v1479 = vmax.f32 %v1302, %v1449
    %v1480 = vmax.f32 %v1303, %v1454
    %v1481 = vmax.f32 %v1304, %v1459
    %v1482 = vmax.f32 %v1305, %v1464
    %v1483 = vmul.f32 %v1467, %v1467
    %v1484 = vmul.f32 %v1468, %v1468
    %v1485 = vmul.f32 %v1469, %v1469
    %v1486 = vmul.f32 %v1470, %v1470
    %v1487 = vmul.f32 %v1471, %v1471
    %v1488 = vmul.f32 %v1472, %v1472
    %v1489 = vmul.f32 %v1473, %v1473
    %v1490 = vmul.f32 %v1474, %v1474
    %v1491 = vmul.f32 %v1475, %v1475
    %v1492 = vmul.f32 %v1476, %v1476
    %v1493 = vmul.f32 %v1477, %v1477
    %v1494 = vmul.f32 %v1478, %v1478
    %v1495 = vmul.f32 %v1479, %v1479
    %v1496 = vmul.f32 %v1480, %v1480
    %v1497 = vmul.f32 %v1481, %v1481
    %v1498 = vmul.f32 %v1482, %v1482
    %vm1499 = vcmask 64512
    %v1500 = vsel %vm1499, %v1483, 0.0
    %v1501 = vsel %vm1499, %v1484, 0.0
    %v1502 = vadd.f32 %v1500, %v1501
    %v1503 = vsel %vm1499, %v1485, 0.0
    %v1504 = vadd.f32 %v1502, %v1503
    %v1505 = vsel %vm1499, %v1486, 0.0
    %v1506 = vadd.f32 %v1504, %v1505
    %v1507 = vsel %vm1499, %v1487, 0.0
    %v1508 = vadd.f32 %v1506, %v1507
    %v1509 = vsel %vm1499, %v1488, 0.0
    %v1510 = vadd.f32 %v1508, %v1509
    %v1511 = vsel %vm1499, %v1489, 0.0
    %v1512 = vadd.f32 %v1510, %v1511
    %v1513 = vsel %vm1499, %v1490, 0.0
    %v1514 = vadd.f32 %v1512, %v1513
    %v1515 = vsel %vm1499, %v1491, 0.0
    %v1516 = vadd.f32 %v1514, %v1515
    %v1517 = vsel %vm1499, %v1492, 0.0
    %v1518 = vadd.f32 %v1516, %v1517
    %v1519 = vsel %vm1499, %v1493, 0.0
    %v1520 = vadd.f32 %v1518, %v1519
    %v1521 = vsel %vm1499, %v1494, 0.0
    %v1522 = vadd.f32 %v1520, %v1521
    %v1523 = vsel %vm1499, %v1495, 0.0
    %v1524 = vadd.f32 %v1522, %v1523
    %v1525 = vsel %vm1499, %v1496, 0.0
    %v1526 = vadd.f32 %v1524, %v1525
    %v1527 = vsel %vm1499, %v1497, 0.0
    %v1528 = vadd.f32 %v1526, %v1527
    %v1529 = vsel %vm1499, %v1498, 0.0
    %v1530 = vadd.f32 %v1528, %v1529
    %v1531 = vrot.slane %v1530, 4
    %v1532 = vadd.f32 %v1530, %v1531
    %v1533 = vrot.slane %v1532, 2
    %v1534 = vadd.f32 %v1532, %v1533
    %v1535 = vrot.slane %v1534, 1
    %v1536 = vadd.f32 %v1534, %v1535
    %v1537 = vmax.f32 %v1536, 1e-16
    %v1538 = vrsqrt.pop %v1537
    %vm1539 = vcmask 130112
    %v1540 = vsel %vm1539, %v1483, 0.0
    %v1541 = vsel %vm1539, %v1484, 0.0
    %v1542 = vadd.f32 %v1540, %v1541
    %v1543 = vsel %vm1539, %v1485, 0.0
    %v1544 = vadd.f32 %v1542, %v1543
    %v1545 = vsel %vm1539, %v1486, 0.0
    %v1546 = vadd.f32 %v1544, %v1545
    %v1547 = vsel %vm1539, %v1487, 0.0
    %v1548 = vadd.f32 %v1546, %v1547
    %v1549 = vsel %vm1539, %v1488, 0.0
    %v1550 = vadd.f32 %v1548, %v1549
    %v1551 = vsel %vm1539, %v1489, 0.0
    %v1552 = vadd.f32 %v1550, %v1551
    %v1553 = vsel %vm1539, %v1490, 0.0
    %v1554 = vadd.f32 %v1552, %v1553
    %v1555 = vsel %vm1539, %v1491, 0.0
    %v1556 = vadd.f32 %v1554, %v1555
    %v1557 = vsel %vm1539, %v1492, 0.0
    %v1558 = vadd.f32 %v1556, %v1557
    %v1559 = vsel %vm1539, %v1493, 0.0
    %v1560 = vadd.f32 %v1558, %v1559
    %v1561 = vsel %vm1539, %v1494, 0.0
    %v1562 = vadd.f32 %v1560, %v1561
    %v1563 = vsel %vm1539, %v1495, 0.0
    %v1564 = vadd.f32 %v1562, %v1563
    %v1565 = vsel %vm1539, %v1496, 0.0
    %v1566 = vadd.f32 %v1564, %v1565
    %v1567 = vsel %vm1539, %v1497, 0.0
    %v1568 = vadd.f32 %v1566, %v1567
    %v1569 = vsel %vm1539, %v1498, 0.0
    %v1570 = vadd.f32 %v1568, %v1569
    %v1571 = vrot.slane %v1570, 4
    %v1572 = vadd.f32 %v1570, %v1571
    %v1573 = vrot.slane %v1572, 2
    %v1574 = vadd.f32 %v1572, %v1573
    %v1575 = vrot.slane %v1574, 1
    %v1576 = vadd.f32 %v1574, %v1575
    %v1577 = vmax.f32 %v1576, 1e-16
    %v1578 = vrsqrt.pop %v1577
    %vm1579 = vcmask 195712
    %v1580 = vsel %vm1579, %v1483, 0.0
    %v1581 = vsel %vm1579, %v1484, 0.0
    %v1582 = vadd.f32 %v1580, %v1581
    %v1583 = vsel %vm1579, %v1485, 0.0
    %v1584 = vadd.f32 %v1582, %v1583
    %v1585 = vsel %vm1579, %v1486, 0.0
    %v1586 = vadd.f32 %v1584, %v1585
    %v1587 = vsel %vm1579, %v1487, 0.0
    %v1588 = vadd.f32 %v1586, %v1587
    %v1589 = vsel %vm1579, %v1488, 0.0
    %v1590 = vadd.f32 %v1588, %v1589
    %v1591 = vsel %vm1579, %v1489, 0.0
    %v1592 = vadd.f32 %v1590, %v1591
    %v1593 = vsel %vm1579, %v1490, 0.0
    %v1594 = vadd.f32 %v1592, %v1593
    %v1595 = vsel %vm1579, %v1491, 0.0
    %v1596 = vadd.f32 %v1594, %v1595
    %v1597 = vsel %vm1579, %v1492, 0.0
    %v1598 = vadd.f32 %v1596, %v1597
    %v1599 = vsel %vm1579, %v1493, 0.0
    %v1600 = vadd.f32 %v1598, %v1599
    %v1601 = vsel %vm1579, %v1494, 0.0
    %v1602 = vadd.f32 %v1600, %v1601
    %v1603 = vsel %vm1579, %v1495, 0.0
    %v1604 = vadd.f32 %v1602, %v1603
    %v1605 = vsel %vm1579, %v1496, 0.0
    %v1606 = vadd.f32 %v1604, %v1605
    %v1607 = vsel %vm1579, %v1497, 0.0
    %v1608 = vadd.f32 %v1606, %v1607
    %v1609 = vsel %vm1579, %v1498, 0.0
    %v1610 = vadd.f32 %v1608, %v1609
    %v1611 = vrot.slane %v1610, 4
    %v1612 = vadd.f32 %v1610, %v1611
    %v1613 = vrot.slane %v1612, 2
    %v1614 = vadd.f32 %v1612, %v1613
    %v1615 = vrot.slane %v1614, 1
    %v1616 = vadd.f32 %v1614, %v1615
    %v1617 = vmax.f32 %v1616, 1e-16
    %v1618 = vrsqrt.pop %v1617
    %1635 = vrot.lane.b32.xlu0 %v1467, 120
    %v1636 = vpop.permute.xlu0 %1635
    %1637 = vrot.lane.b32.xlu0 %v1468, 120
    %v1638 = vpop.permute.xlu0 %1637
    %1639 = vrot.lane.b32.xlu0 %v1469, 120
    %v1640 = vpop.permute.xlu0 %1639
    %1641 = vrot.lane.b32.xlu0 %v1470, 120
    %v1642 = vpop.permute.xlu0 %1641
    %1643 = vrot.lane.b32.xlu0 %v1471, 120
    %v1644 = vpop.permute.xlu0 %1643
    %1645 = vrot.lane.b32.xlu0 %v1472, 120
    %v1646 = vpop.permute.xlu0 %1645
    %1647 = vrot.lane.b32.xlu0 %v1473, 120
    %v1648 = vpop.permute.xlu0 %1647
    %1649 = vrot.lane.b32.xlu0 %v1474, 120
    %v1650 = vpop.permute.xlu0 %1649
    %1651 = vrot.lane.b32.xlu0 %v1475, 120
    %v1652 = vpop.permute.xlu0 %1651
    %1653 = vrot.lane.b32.xlu0 %v1476, 120
    %v1654 = vpop.permute.xlu0 %1653
    %1655 = vrot.lane.b32.xlu0 %v1477, 120
    %v1656 = vpop.permute.xlu0 %1655
    %1657 = vrot.lane.b32.xlu0 %v1478, 120
    %v1658 = vpop.permute.xlu0 %1657
    %1659 = vrot.lane.b32.xlu0 %v1479, 120
    %v1660 = vpop.permute.xlu0 %1659
    %1661 = vrot.lane.b32.xlu0 %v1480, 120
    %v1662 = vpop.permute.xlu0 %1661
    %1663 = vrot.lane.b32.xlu0 %v1481, 120
    %v1664 = vpop.permute.xlu0 %1663
    %1665 = vrot.lane.b32.xlu0 %v1482, 120
    %v1666 = vpop.permute.xlu0 %1665
    %v1683 = vmul.f32 %v1467, %v1636
    %v1684 = vmul.f32 %v1468, %v1638
    %v1685 = vmul.f32 %v1469, %v1640
    %v1686 = vmul.f32 %v1470, %v1642
    %v1687 = vmul.f32 %v1471, %v1644
    %v1688 = vmul.f32 %v1472, %v1646
    %v1689 = vmul.f32 %v1473, %v1648
    %v1690 = vmul.f32 %v1474, %v1650
    %v1691 = vmul.f32 %v1475, %v1652
    %v1692 = vmul.f32 %v1476, %v1654
    %v1693 = vmul.f32 %v1477, %v1656
    %v1694 = vmul.f32 %v1478, %v1658
    %v1695 = vmul.f32 %v1479, %v1660
    %v1696 = vmul.f32 %v1480, %v1662
    %v1697 = vmul.f32 %v1481, %v1664
    %v1698 = vmul.f32 %v1482, %v1666
    %v1699 = vsel %vm1499, %v1683, 0.0
    %v1700 = vsel %vm1499, %v1684, 0.0
    %v1701 = vadd.f32 %v1699, %v1700
    %v1702 = vsel %vm1499, %v1685, 0.0
    %v1703 = vadd.f32 %v1701, %v1702
    %v1704 = vsel %vm1499, %v1686, 0.0
    %v1705 = vadd.f32 %v1703, %v1704
    %v1706 = vsel %vm1499, %v1687, 0.0
    %v1707 = vadd.f32 %v1705, %v1706
    %v1708 = vsel %vm1499, %v1688, 0.0
    %v1709 = vadd.f32 %v1707, %v1708
    %v1710 = vsel %vm1499, %v1689, 0.0
    %v1711 = vadd.f32 %v1709, %v1710
    %v1712 = vsel %vm1499, %v1690, 0.0
    %v1713 = vadd.f32 %v1711, %v1712
    %v1714 = vsel %vm1499, %v1691, 0.0
    %v1715 = vadd.f32 %v1713, %v1714
    %v1716 = vsel %vm1499, %v1692, 0.0
    %v1717 = vadd.f32 %v1715, %v1716
    %v1718 = vsel %vm1499, %v1693, 0.0
    %v1719 = vadd.f32 %v1717, %v1718
    %v1720 = vsel %vm1499, %v1694, 0.0
    %v1721 = vadd.f32 %v1719, %v1720
    %v1722 = vsel %vm1499, %v1695, 0.0
    %v1723 = vadd.f32 %v1721, %v1722
    %v1724 = vsel %vm1499, %v1696, 0.0
    %v1725 = vadd.f32 %v1723, %v1724
    %v1726 = vsel %vm1499, %v1697, 0.0
    %v1727 = vadd.f32 %v1725, %v1726
    %v1728 = vsel %vm1499, %v1698, 0.0
    %v1729 = vadd.f32 %v1727, %v1728
    %v1730 = vrot.slane %v1729, 4
    %v1731 = vadd.f32 %v1729, %v1730
    %v1732 = vrot.slane %v1731, 2
    %v1733 = vadd.f32 %v1731, %v1732
    %v1734 = vrot.slane %v1733, 1
    %v1735 = vadd.f32 %v1733, %v1734
    %v1736 = vmul.f32 %v1735, %v1538
    %1738 = vrot.lane.b32.xlu0 %v1578, 120
    %v1739 = vpop.permute.xlu0 %1738
    %v1741 = vmul.f32 %v1736, %v1739
    %v1742 = vsub.f32 1.0, %v1741
    %1743 = vrot.lane.b32.xlu0 %v1467, 112
    %v1744 = vpop.permute.xlu0 %1743
    %1745 = vrot.lane.b32.xlu0 %v1468, 112
    %v1746 = vpop.permute.xlu0 %1745
    %1747 = vrot.lane.b32.xlu0 %v1469, 112
    %v1748 = vpop.permute.xlu0 %1747
    %1749 = vrot.lane.b32.xlu0 %v1470, 112
    %v1750 = vpop.permute.xlu0 %1749
    %1751 = vrot.lane.b32.xlu0 %v1471, 112
    %v1752 = vpop.permute.xlu0 %1751
    %1753 = vrot.lane.b32.xlu0 %v1472, 112
    %v1754 = vpop.permute.xlu0 %1753
    %1755 = vrot.lane.b32.xlu0 %v1473, 112
    %v1756 = vpop.permute.xlu0 %1755
    %1757 = vrot.lane.b32.xlu0 %v1474, 112
    %v1758 = vpop.permute.xlu0 %1757
    %1759 = vrot.lane.b32.xlu0 %v1475, 112
    %v1760 = vpop.permute.xlu0 %1759
    %1761 = vrot.lane.b32.xlu0 %v1476, 112
    %v1762 = vpop.permute.xlu0 %1761
    %1763 = vrot.lane.b32.xlu0 %v1477, 112
    %v1764 = vpop.permute.xlu0 %1763
    %1765 = vrot.lane.b32.xlu0 %v1478, 112
    %v1766 = vpop.permute.xlu0 %1765
    %1767 = vrot.lane.b32.xlu0 %v1479, 112
    %v1768 = vpop.permute.xlu0 %1767
    %1769 = vrot.lane.b32.xlu0 %v1480, 112
    %v1770 = vpop.permute.xlu0 %1769
    %1771 = vrot.lane.b32.xlu0 %v1481, 112
    %v1772 = vpop.permute.xlu0 %1771
    %1773 = vrot.lane.b32.xlu0 %v1482, 112
    %v1774 = vpop.permute.xlu0 %1773
    %v1791 = vmul.f32 %v1467, %v1744
    %v1792 = vmul.f32 %v1468, %v1746
    %v1793 = vmul.f32 %v1469, %v1748
    %v1794 = vmul.f32 %v1470, %v1750
    %v1795 = vmul.f32 %v1471, %v1752
    %v1796 = vmul.f32 %v1472, %v1754
    %v1797 = vmul.f32 %v1473, %v1756
    %v1798 = vmul.f32 %v1474, %v1758
    %v1799 = vmul.f32 %v1475, %v1760
    %v1800 = vmul.f32 %v1476, %v1762
    %v1801 = vmul.f32 %v1477, %v1764
    %v1802 = vmul.f32 %v1478, %v1766
    %v1803 = vmul.f32 %v1479, %v1768
    %v1804 = vmul.f32 %v1480, %v1770
    %v1805 = vmul.f32 %v1481, %v1772
    %v1806 = vmul.f32 %v1482, %v1774
    %v1807 = vsel %vm1499, %v1791, 0.0
    %v1808 = vsel %vm1499, %v1792, 0.0
    %v1809 = vadd.f32 %v1807, %v1808
    %v1810 = vsel %vm1499, %v1793, 0.0
    %v1811 = vadd.f32 %v1809, %v1810
    %v1812 = vsel %vm1499, %v1794, 0.0
    %v1813 = vadd.f32 %v1811, %v1812
    %v1814 = vsel %vm1499, %v1795, 0.0
    %v1815 = vadd.f32 %v1813, %v1814
    %v1816 = vsel %vm1499, %v1796, 0.0
    %v1817 = vadd.f32 %v1815, %v1816
    %v1818 = vsel %vm1499, %v1797, 0.0
    %v1819 = vadd.f32 %v1817, %v1818
    %v1820 = vsel %vm1499, %v1798, 0.0
    %v1821 = vadd.f32 %v1819, %v1820
    %v1822 = vsel %vm1499, %v1799, 0.0
    %v1823 = vadd.f32 %v1821, %v1822
    %v1824 = vsel %vm1499, %v1800, 0.0
    %v1825 = vadd.f32 %v1823, %v1824
    %v1826 = vsel %vm1499, %v1801, 0.0
    %v1827 = vadd.f32 %v1825, %v1826
    %v1828 = vsel %vm1499, %v1802, 0.0
    %v1829 = vadd.f32 %v1827, %v1828
    %v1830 = vsel %vm1499, %v1803, 0.0
    %v1831 = vadd.f32 %v1829, %v1830
    %v1832 = vsel %vm1499, %v1804, 0.0
    %v1833 = vadd.f32 %v1831, %v1832
    %v1834 = vsel %vm1499, %v1805, 0.0
    %v1835 = vadd.f32 %v1833, %v1834
    %v1836 = vsel %vm1499, %v1806, 0.0
    %v1837 = vadd.f32 %v1835, %v1836
    %v1838 = vrot.slane %v1837, 4
    %v1839 = vadd.f32 %v1837, %v1838
    %v1840 = vrot.slane %v1839, 2
    %v1841 = vadd.f32 %v1839, %v1840
    %v1842 = vrot.slane %v1841, 1
    %v1843 = vadd.f32 %v1841, %v1842
    %v1844 = vmul.f32 %v1843, %v1538
    %1846 = vrot.lane.b32.xlu0 %v1618, 112
    %v1847 = vpop.permute.xlu0 %1846
    %v1849 = vmul.f32 %v1844, %v1847
    %v1850 = vsub.f32 1.0, %v1849
    %vm1851 = vcmask 57344
    %1852 = vst.msk [vmem:[#allocation2] sm:$0x1] %vm1851, %v1742
    %1853 = vst.msk [vmem:[#allocation2 + $0x1] sm:$0x1] %vm1851, %v1850
    // Predicated region
    $region10: #{tpu_custom_call.1} parent=1 // pred_check
      _
    $region11: #{tpu_custom_call.1} parent=1 // pred_check_branch
      %1855 = sbr.rel (0) target = $region13
    $region12: #{tpu_custom_call.1} parent=1 // pred_region
      %s1857 = ssub.s32 32, 32
      %1858 = vsyncadd [#allocation3], %s1857
      %s1860 = sshll.u32 [#allocation2], 4
      %s1861 = int_to_ptr.vmem [resolvable:$true] %s1860
      %1863 = dma.vmem_to_hbm [thread:$0]  %s1861, 32, %s2, [#allocation3]
    $region13: #{tpu_custom_call.1} parent=1 // pred_fallthru
      _
    // Predicated region
    $region14: #{tpu_custom_call.1} parent=1 // pred_check
      _
    $region15: #{tpu_custom_call.1} parent=1 // pred_check_branch
      %1865 = sbr.rel (0) target = $region17
    $region16: #{tpu_custom_call.1} parent=1 // pred_region
      %1866 = dma.done [#allocation3], 32
    $region17: #{tpu_custom_call.1} parent=1 // pred_fallthru
      _
    %1867 = vsyncpa [#allocation3], 1

</llo_original>
